<compile_context>
chip_gen: v7x
topology: tpu7x:2x2x1
jax: 0.10.0
libtpu: 0.0.40
codegen_flags: <defaults>
</compile_context>

<pallas_src>
import math

import jax
import jax.numpy as jnp
from jax import lax
from jax.experimental import pallas as pl
from jax.experimental.pallas import tpu as pltpu

_VMEM_LIMIT = 32 * 1024 * 1024  # safe on v5e/v6e (128 MiB) and v7x (64 MiB physical)


# --------------------------------------------------------------------------
# Kernel A: ClapProjectionLayer (Linear -> ReLU -> Linear) + L2 normalize
# --------------------------------------------------------------------------
def _projection_kernel(x_ref, w1_ref, b1_ref, w2_ref, b2_ref, out_ref):
    # x: (tm, hidden) bf16, w1: (hidden, proj) bf16, b1/b2: (1, proj) f32,
    # w2: (proj, proj) bf16, out: (tm, proj) bf16.
    h = jnp.dot(x_ref[...], w1_ref[...], preferred_element_type=jnp.float32)
    h = jnp.maximum(h + b1_ref[...], 0.0)                      # ReLU in f32
    e = jnp.dot(h.astype(jnp.bfloat16), w2_ref[...],
                preferred_element_type=jnp.float32)
    e = e + b2_ref[...]
    # L2 normalize in f32 (eps for robustness against all-zero rows).
    e = e * lax.rsqrt(jnp.sum(e * e, axis=-1, keepdims=True) + 1e-12)
    out_ref[...] = e.astype(out_ref.dtype)


def project_and_normalize(x_bf16, w1_bf16, b1_f32, w2_bf16, b2_f32, *, tile_m=None):
    """Gridded projection over batch tiles. Returns normalized bf16 embeddings."""
    B, hidden = x_bf16.shape
    proj = w1_bf16.shape[1]
    if tile_m is None:
        tile_m = 64 if B % 64 == 0 else B
    grid = (B // tile_m,)

    flops = 2 * B * (hidden * proj + proj * proj)
    bytes_accessed = (B * hidden * 2            # features (bf16)
                      + (hidden * proj + proj * proj) * 2   # weights (bf16)
                      + 2 * proj * 4            # biases (f32)
                      + B * proj * 2)           # output (bf16)

    return pl.pallas_call(
        _projection_kernel,
        out_shape=jax.ShapeDtypeStruct((B, proj), jnp.bfloat16),
        grid_spec=pltpu.PrefetchScalarGridSpec(
            num_scalar_prefetch=0,
            grid=grid,
            in_specs=[
                pl.BlockSpec((tile_m, hidden), lambda i: (i, 0)),
                pl.BlockSpec((hidden, proj), lambda i: (0, 0)),
                pl.BlockSpec((1, proj), lambda i: (0, 0)),
                pl.BlockSpec((proj, proj), lambda i: (0, 0)),
                pl.BlockSpec((1, proj), lambda i: (0, 0)),
            ],
            out_specs=pl.BlockSpec((tile_m, proj), lambda i: (i, 0)),
        ),
        compiler_params=pltpu.CompilerParams(
            dimension_semantics=("parallel",),
            vmem_limit_bytes=_VMEM_LIMIT),
        cost_estimate=pl.CostEstimate(
            flops=flops, transcendentals=B, bytes_accessed=bytes_accessed),
    )(x_bf16, w1_bf16, b1_f32, w2_bf16, b2_f32)


# --------------------------------------------------------------------------
# Kernel B: clamped cosine similarity   score = max(a_emb @ t_emb.T, 0)
# (logits_per_audio / exp(logit_scale_a) == a_emb @ t_emb.T, scale cancels)
# --------------------------------------------------------------------------
def _clamped_similarity_kernel(a_ref, t_ref, score_ref):
    sim = lax.dot_general(a_ref[...], t_ref[...],
                          (((1,), (1,)), ((), ())),
                          preferred_element_type=jnp.float32)   # (tm, tn) f32
    score_ref[...] = jnp.maximum(sim, 0.0)


def clamped_cosine_scores(a_emb, t_emb, *, tile_m=None, tile_n=None):
    Ba, proj = a_emb.shape
    Bt = t_emb.shape[0]
    if tile_m is None:
        tile_m = 64 if Ba % 64 == 0 else Ba
    if tile_n is None:
        tile_n = 128 if Bt % 128 == 0 else Bt
    grid = (Ba // tile_m, Bt // tile_n)

    flops = 2 * Ba * Bt * proj
    bytes_accessed = (Ba + Bt) * proj * 2 + Ba * Bt * 4

    return pl.pallas_call(
        _clamped_similarity_kernel,
        out_shape=jax.ShapeDtypeStruct((Ba, Bt), jnp.float32),
        grid_spec=pltpu.PrefetchScalarGridSpec(
            num_scalar_prefetch=0,
            grid=grid,
            in_specs=[
                pl.BlockSpec((tile_m, proj), lambda i, j: (i, 0)),
                pl.BlockSpec((tile_n, proj), lambda i, j: (j, 0)),
            ],
            out_specs=pl.BlockSpec((tile_m, tile_n), lambda i, j: (i, j)),
        ),
        compiler_params=pltpu.CompilerParams(
            dimension_semantics=("parallel", "parallel"),
            vmem_limit_bytes=_VMEM_LIMIT),
        cost_estimate=pl.CostEstimate(
            flops=flops, transcendentals=0, bytes_accessed=bytes_accessed),
    )(a_emb, t_emb)


# --------------------------------------------------------------------------
# Forward wrapper (mirrors CLAPEvaluator.calc_score hot path)
# --------------------------------------------------------------------------
def clap_text_embeds(text_feats, params):
    """Separate call so normalized text embeddings can be cached / reused."""
    return project_and_normalize(
        text_feats.astype(jnp.bfloat16),
        params["tw1"].astype(jnp.bfloat16), params["tb1"],
        params["tw2"].astype(jnp.bfloat16), params["tb2"])


def clap_audio_embeds(audio_feats, params):
    return project_and_normalize(
        audio_feats.astype(jnp.bfloat16),
        params["aw1"].astype(jnp.bfloat16), params["ab1"],
        params["aw2"].astype(jnp.bfloat16), params["ab2"])


def clap_evaluator_forward(text_feats, audio_feats, params):
    """Returns the clamped score matrix (Ba, Bt).

    For BT == BA == 1 this is the scalar `.item()` of the reference (after
    squeeze); `params["logit_scale_a"]` is kept for faithfulness but cancels
    out of the score, so scaled logits are never materialized.
    """
    t_emb = clap_text_embeds(text_feats, params)
    a_emb = clap_audio_embeds(audio_feats, params)
    return clamped_cosine_scores(a_emb, t_emb)


def init_params(key, text_hidden, audio_hidden, proj_dim):
    ks = jax.random.split(key, 8)
    s = 0.02
    return {
        # text ClapProjectionLayer: Linear(text_hidden, proj) -> ReLU -> Linear(proj, proj)
        "tw1": s * jax.random.normal(ks[0], (text_hidden, proj_dim), jnp.float32),
        "tb1": s * jax.random.normal(ks[1], (1, proj_dim), jnp.float32),
        "tw2": s * jax.random.normal(ks[2], (proj_dim, proj_dim), jnp.float32),
        "tb2": s * jax.random.normal(ks[3], (1, proj_dim), jnp.float32),
        # audio ClapProjectionLayer: Linear(audio_hidden, proj) -> ReLU -> Linear(proj, proj)
        "aw1": s * jax.random.normal(ks[4], (audio_hidden, proj_dim), jnp.float32),
        "ab1": s * jax.random.normal(ks[5], (1, proj_dim), jnp.float32),
        "aw2": s * jax.random.normal(ks[6], (proj_dim, proj_dim), jnp.float32),
        "ab2": s * jax.random.normal(ks[7], (1, proj_dim), jnp.float32),
        # CLAP init: log(1 / 0.07) — cancels in the score, kept for fidelity.
        "logit_scale_a": jnp.array([math.log(1.0 / 0.07)], jnp.float32),
    }


if __name__ == "__main__":
    # Real CLAP feature geometry (lane/sublane aligned), modest batches.
    TEXT_HIDDEN = 768    # pooled RoBERTa feature dim
    AUDIO_HIDDEN = 768   # pooled HTSAT feature dim
    PROJ_DIM = 512       # CLAP projection dim
    BT, BA = 128, 128    # text / audio batch (lane-dense score tile)

    key = jax.random.PRNGKey(0)
    k_text, k_audio, k_params = jax.random.split(key, 3)

    text_feats = jax.random.normal(k_text, (BT, TEXT_HIDDEN), jnp.float32)
    audio_feats = jax.random.normal(k_audio, (BA, AUDIO_HIDDEN), jnp.float32)
    params = init_params(k_params, TEXT_HIDDEN, AUDIO_HIDDEN, PROJ_DIM)

    score = clap_evaluator_forward(text_feats, audio_feats, params)
    score = jax.block_until_ready(score)

    # Pure-JAX reference with the same bf16-input / f32-accumulate recipe.
    def ref(text, audio, p):
        def proj(x, w1, b1, w2, b2):
            h = jnp.dot(x.astype(jnp.bfloat16), w1.astype(jnp.bfloat16),
                        preferred_element_type=jnp.float32) + b1
            h = jnp.maximum(h, 0.0)
            e = jnp.dot(h.astype(jnp.bfloat16), w2.astype(jnp.bfloat16),
                        preferred_element_type=jnp.float32) + b2
            e = e * lax.rsqrt(jnp.sum(e * e, axis=-1, keepdims=True) + 1e-12)
            return e.astype(jnp.bfloat16)

        t = proj(text, p["tw1"], p["tb1"], p["tw2"], p["tb2"])
        a = proj(audio, p["aw1"], p["ab1"], p["aw2"], p["ab2"])
        sim = lax.dot_general(a, t, (((1,), (1,)), ((), ())),
                              preferred_element_type=jnp.float32)
        return jnp.maximum(sim, 0.0)

    expected = ref(text_feats, audio_feats, params)
    assert score.shape == (BA, BT)
    assert jnp.allclose(score, expected, atol=5e-3, rtol=5e-3), (
        float(jnp.max(jnp.abs(score - expected))))

    print("KERNEL_OK")
</pallas_src>

<mosaic_0001>
module attributes {stable_mosaic.version = 11 : i64} {
  func.func @_projection_kernel(%arg0: i32, %arg1: memref<64x768xbf16, #tpu.memory_space<vmem>>, %arg2: memref<768x512xbf16, #tpu.memory_space<vmem>>, %arg3: memref<1x512xf32, #tpu.memory_space<vmem>>, %arg4: memref<512x512xbf16, #tpu.memory_space<vmem>>, %arg5: memref<1x512xf32, #tpu.memory_space<vmem>>, %arg6: memref<64x512xbf16, #tpu.memory_space<vmem>>) attributes {dimension_semantics = [#tpu.dimension_semantics<parallel>], iteration_bounds = array<i64: 2>, scalar_prefetch = 0 : i64, scratch_operands = 0 : i64, tpu.core_type = #tpu.core_type<tc>, window_params = [{transform_indices = @transform_0, window_bounds = array<i64: 64, 768>}, {pipeline_mode = #tpu.pipeline_mode<synchronous>, transform_indices = @transform_1, window_bounds = array<i64: 768, 512>}, {pipeline_mode = #tpu.pipeline_mode<synchronous>, transform_indices = @transform_2, window_bounds = array<i64: 1, 512>}, {pipeline_mode = #tpu.pipeline_mode<synchronous>, transform_indices = @transform_3, window_bounds = array<i64: 512, 512>}, {pipeline_mode = #tpu.pipeline_mode<synchronous>, transform_indices = @transform_4, window_bounds = array<i64: 1, 512>}, {transform_indices = @transform_5, window_bounds = array<i64: 64, 512>}]} {
    %c0 = arith.constant 0 : index
    %c0_0 = arith.constant 0 : index
    %0 = vector.load %arg1[%c0, %c0_0] : memref<64x768xbf16, #tpu.memory_space<vmem>>, vector<64x768xbf16>
    %c0_1 = arith.constant 0 : index
    %c0_2 = arith.constant 0 : index
    %1 = vector.load %arg2[%c0_1, %c0_2] : memref<768x512xbf16, #tpu.memory_space<vmem>>, vector<768x512xbf16>
    %cst = arith.constant dense<0.000000e+00> : vector<64x512xf32>
    %2 = tpu.matmul %0, %1, %cst {dimension_numbers = #tpu.dot_dimension_numbers<[1], [0], [0], [1], [0, 0, 1, 1], [], []>} : vector<64x768xbf16>, vector<768x512xbf16>, vector<64x512xf32> -> vector<64x512xf32>
    %c0_3 = arith.constant 0 : index
    %c0_4 = arith.constant 0 : index
    %3 = vector.load %arg3[%c0_3, %c0_4] : memref<1x512xf32, #tpu.memory_space<vmem>>, vector<1x512xf32>
    %4 = vector.broadcast %3 : vector<1x512xf32> to vector<64x512xf32>
    %5 = arith.addf %2, %4 : vector<64x512xf32>
    %cst_5 = arith.constant 0.000000e+00 : f32
    %6 = vector.broadcast %cst_5 : f32 to vector<64x512xf32>
    %7 = arith.maximumf %5, %6 : vector<64x512xf32>
    %8 = arith.truncf %7 : vector<64x512xf32> to vector<64x512xbf16>
    %c0_6 = arith.constant 0 : index
    %c0_7 = arith.constant 0 : index
    %9 = vector.load %arg4[%c0_6, %c0_7] : memref<512x512xbf16, #tpu.memory_space<vmem>>, vector<512x512xbf16>
    %cst_8 = arith.constant dense<0.000000e+00> : vector<64x512xf32>
    %10 = tpu.matmul %8, %9, %cst_8 {dimension_numbers = #tpu.dot_dimension_numbers<[1], [0], [0], [1], [0, 0, 1, 1], [], []>} : vector<64x512xbf16>, vector<512x512xbf16>, vector<64x512xf32> -> vector<64x512xf32>
    %c0_9 = arith.constant 0 : index
    %c0_10 = arith.constant 0 : index
    %11 = vector.load %arg5[%c0_9, %c0_10] : memref<1x512xf32, #tpu.memory_space<vmem>>, vector<1x512xf32>
    %12 = vector.broadcast %11 : vector<1x512xf32> to vector<64x512xf32>
    %13 = arith.addf %10, %12 : vector<64x512xf32>
    %14 = arith.mulf %13, %13 : vector<64x512xf32>
    %cst_11 = arith.constant dense<0.000000e+00> : vector<64xf32>
    %15 = vector.multi_reduction <add>, %14, %cst_11 [1] : vector<64x512xf32> to vector<64xf32>
    %16 = vector.shape_cast %15 : vector<64xf32> to vector<64x1xf32>
    %cst_12 = arith.constant 9.99999996E-13 : f32
    %17 = vector.broadcast %cst_12 : f32 to vector<64x1xf32>
    %18 = arith.addf %16, %17 : vector<64x1xf32>
    %19 = math.rsqrt %18 : vector<64x1xf32>
    %20 = vector.broadcast %19 : vector<64x1xf32> to vector<64x512xf32>
    %21 = arith.mulf %13, %20 : vector<64x512xf32>
    %22 = arith.truncf %21 : vector<64x512xf32> to vector<64x512xbf16>
    %c0_13 = arith.constant 0 : index
    %c0_14 = arith.constant 0 : index
    %23 = vector.load %arg6[%c0_13, %c0_14] : memref<64x512xbf16, #tpu.memory_space<vmem>>, vector<64x512xbf16>
    tpu.vector_store %arg6[%c0_13, %c0_14], %22 {strides = array<i32>} : memref<64x512xbf16, #tpu.memory_space<vmem>>, vector<64x512xbf16>,
    return
  }
  func.func @transform_0(%arg0: i32) -> (i32, i32) {
    %c0_i32 = arith.constant 0 : i32
    %c0_i32_0 = arith.constant 0 : i32
    return %arg0, %c0_i32 : i32, i32
  }
  func.func @transform_1(%arg0: i32) -> (i32, i32) {
    %c0_i32 = arith.constant 0 : i32
    %c0_i32_0 = arith.constant 0 : i32
    %c0_i32_1 = arith.constant 0 : i32
    return %c0_i32, %c0_i32_0 : i32, i32
  }
  func.func @transform_2(%arg0: i32) -> (i32, i32) {
    %c0_i32 = arith.constant 0 : i32
    %c0_i32_0 = arith.constant 0 : i32
    %c0_i32_1 = arith.constant 0 : i32
    return %c0_i32, %c0_i32_0 : i32, i32
  }
  func.func @transform_3(%arg0: i32) -> (i32, i32) {
    %c0_i32 = arith.constant 0 : i32
    %c0_i32_0 = arith.constant 0 : i32
    %c0_i32_1 = arith.constant 0 : i32
    return %c0_i32, %c0_i32_0 : i32, i32
  }
  func.func @transform_4(%arg0: i32) -> (i32, i32) {
    %c0_i32 = arith.constant 0 : i32
    %c0_i32_0 = arith.constant 0 : i32
    %c0_i32_1 = arith.constant 0 : i32
    return %c0_i32, %c0_i32_0 : i32, i32
  }
  func.func @transform_5(%arg0: i32) -> (i32, i32) {
    %c0_i32 = arith.constant 0 : i32
    %c0_i32_0 = arith.constant 0 : i32
    return %arg0, %c0_i32 : i32, i32
  }
}

</mosaic_0001>

<llo_original>
// kernel: tpu_custom_call.1
$region0: #{tpu_custom_call.1}
  #allocation0 [shape = 'u32[]', space=smem, size = 0x4, offset = 0x4, fixed_abs, tag = 'smem constant byte address 0x4 - core index']
  #allocation1 [shape = 'u32[144,128]{1,0:T(1,128)}', space=vmem, size = 0x12000, scoped, tag = 'internal scratch']
  %s0 = inlined_call_operand.hbm [shape: bf16[128,768], index: 0, kind: input, shape index: {}]
  %s1 = inlined_call_operand.hbm [shape: bf16[768,512], index: 1, kind: input, shape index: {}]
  %s2 = inlined_call_operand.vmem [shape: f32[1,512], index: 2, kind: input, shape index: {}]
  %s3 = inlined_call_operand.hbm [shape: bf16[512,512], index: 3, kind: input, shape index: {}]
  %s4 = inlined_call_operand.vmem [shape: f32[1,512], index: 4, kind: input, shape index: {}]
  %s5 = inlined_call_operand.hbm [shape: bf16[128,512], index: 5, kind: output, shape index: {}]
  %s6 = sld [smem:[#allocation0]]
  $region65: #{tpu_custom_call.1} parent=0
    _
  %s8 = ssub.s32 1, %s6
  %s9 = scalar_select 0, %s8, %s6
  $region1: #{tpu_custom_call.1} parent=0
    #allocation2 [shape = 'u8[196608]{0}', space=vmem, size = 0x30000, scoped, tag = 'input window, operand 0']
    #allocation3 [shape = 's32[2]{0}', space=sflag, size = 0x8, scoped, tag = 'scoped memory for tpu_custom_call.1']
    #allocation4 [shape = 's32[2]{0}', space=sflag, size = 0x8, scoped, tag = 'scoped memory for tpu_custom_call.1']
    #allocation5 [shape = 'u8[786432]{0}', space=vmem, size = 0xc0000, scoped, tag = 'input window, operand 1, single buffered']
    #allocation6 [shape = 's32[1]{0}', space=sflag, size = 0x4, scoped, tag = 'scoped memory for tpu_custom_call.1']
    #allocation7 [shape = 'u8[524288]{0}', space=vmem, size = 0x80000, scoped, tag = 'input window, operand 3, single buffered']
    #allocation8 [shape = 'u8[131072]{0}', space=vmem, size = 0x20000, scoped, tag = 'output window, operand 0']
    %10 = vsyncpa [#allocation3], 0
    %s11 = scalar_lea.sflag [#allocation3], 1
    %12 = vsyncpa %s11, 0
    %13 = vsyncpa [#allocation6], 0
    %14 = vsyncpa [#allocation4], 0
    %s15 = scalar_lea.sflag [#allocation4], 1
    %16 = vsyncpa %s15, 0
    loop: start=0, step=1, limit=4
    $region2: #{tpu_custom_call.1} parent=1 // loop_pre_header
      _
    $region3: #{tpu_custom_call.1} parent=1 // loop_header
      %s18 = sphi 0, %s22
      %p19 = scmp.ge.s32.totalorder %s18, 4
      %s28 = sphi 0, %s30
      %s31 = sphi 0, %s28
      %s32 = sphi 0, %s31
      %s48 = sphi 0, %s32
      %s52 = sphi 0, %s52
      %s54 = sphi 0, %s52
      %s55 = sphi 0, %s54
      %s69 = sphi 0, %s55
      %s73 = sphi 0, %s73
      %s75 = sphi 0, %s73
      %s76 = sphi 0, %s75
      %s90 = sphi 0, %s76
      %s94 = sphi 0, %s94
      %s96 = sphi 0, %s94
      %s97 = sphi 0, %s96
      %s111 = sphi 0, %s97
      %s115 = sphi 0, %s115
      %s117 = sphi 0, %s115
      %s118 = sphi 0, %s117
      %s132 = sphi 0, %s118
      %s138 = sphi 0, %s140
      %s141 = sphi 0, %s138
      %s142 = sphi 0, %s141
      %s158 = sphi 0, %s142
    $region4: #{tpu_custom_call.1} parent=1 // loop_header_branch
      %21 = sbr.rel (%p19) target = $region8
    $region5: #{tpu_custom_call.1} parent=1 // loop_body
      %s23 = ssub.s32 %s18, 1
      %s24 = ssub.s32 %s18, 2
      %s25 = sadd.s32 %s18, 1
      %s26 = ssub.s32 %s18, %s25
      %p27 = scmp.eq.s32.totalorder %s26, 0
      %s29 = sadd.s32 %s28, 1
      %s30 = scalar_select %p27, %s28, %s29
      %p33 = pneg %p27
      %p34 = scmp.eq.s32.totalorder %s18, 1
      %p35 = por %p33, %p34
      %p36 = scmp.ne.s32.totalorder %s28, %s31
      %p37 = scmp.eq.s32.totalorder %s18, 0
      %p38 = por %p36, %p37
      %p39 = scmp.ne.s32.totalorder %s28, %s31
      %p40 = scmp.eq.s32.totalorder %s23, 1
      %p41 = por %p39, %p40
      %p42 = scmp.ne.s32.totalorder %s31, %s32
      %p43 = scmp.eq.s32.totalorder %s23, 0
      %p44 = por %p42, %p43
      %p45 = scmp.ne.s32.totalorder %s31, %s32
      %p46 = scmp.eq.s32.totalorder %s24, 1
      %p47 = por %p45, %p46
      %p49 = scmp.ne.s32.totalorder %s32, %s48
      %p50 = scmp.eq.s32.totalorder %s24, 0
      %p51 = por %p49, %p50
      %s53 = sadd.s32 %s52, 1
      %p56 = scmp.eq.s32.totalorder %s18, 1
      %p57 = scmp.ne.s32.totalorder %s52, %s54
      %p58 = scmp.eq.s32.totalorder %s18, 0
      %p59 = por %p57, %p58
      %p60 = scmp.ne.s32.totalorder %s52, %s54
      %p61 = scmp.eq.s32.totalorder %s23, 1
      %p62 = por %p60, %p61
      %p63 = scmp.ne.s32.totalorder %s54, %s55
      %p64 = scmp.eq.s32.totalorder %s23, 0
      %p65 = por %p63, %p64
      %p66 = scmp.ne.s32.totalorder %s54, %s55
      %p67 = scmp.eq.s32.totalorder %s24, 1
      %p68 = por %p66, %p67
      %p70 = scmp.ne.s32.totalorder %s55, %s69
      %p71 = scmp.eq.s32.totalorder %s24, 0
      %p72 = por %p70, %p71
      %s74 = sadd.s32 %s73, 1
      %p77 = scmp.eq.s32.totalorder %s18, 1
      %p78 = scmp.ne.s32.totalorder %s73, %s75
      %p79 = scmp.eq.s32.totalorder %s18, 0
      %p80 = por %p78, %p79
      %p81 = scmp.ne.s32.totalorder %s73, %s75
      %p82 = scmp.eq.s32.totalorder %s23, 1
      %p83 = por %p81, %p82
      %p84 = scmp.ne.s32.totalorder %s75, %s76
      %p85 = scmp.eq.s32.totalorder %s23, 0
      %p86 = por %p84, %p85
      %p87 = scmp.ne.s32.totalorder %s75, %s76
      %p88 = scmp.eq.s32.totalorder %s24, 1
      %p89 = por %p87, %p88
      %p91 = scmp.ne.s32.totalorder %s76, %s90
      %p92 = scmp.eq.s32.totalorder %s24, 0
      %p93 = por %p91, %p92
      %s95 = sadd.s32 %s94, 1
      %p98 = scmp.eq.s32.totalorder %s18, 1
      %p99 = scmp.ne.s32.totalorder %s94, %s96
      %p100 = scmp.eq.s32.totalorder %s18, 0
      %p101 = por %p99, %p100
      %p102 = scmp.ne.s32.totalorder %s94, %s96
      %p103 = scmp.eq.s32.totalorder %s23, 1
      %p104 = por %p102, %p103
      %p105 = scmp.ne.s32.totalorder %s96, %s97
      %p106 = scmp.eq.s32.totalorder %s23, 0
      %p107 = por %p105, %p106
      %p108 = scmp.ne.s32.totalorder %s96, %s97
      %p109 = scmp.eq.s32.totalorder %s24, 1
      %p110 = por %p108, %p109
      %p112 = scmp.ne.s32.totalorder %s97, %s111
      %p113 = scmp.eq.s32.totalorder %s24, 0
      %p114 = por %p112, %p113
      %s116 = sadd.s32 %s115, 1
      %p119 = scmp.eq.s32.totalorder %s18, 1
      %p120 = scmp.ne.s32.totalorder %s115, %s117
      %p121 = scmp.eq.s32.totalorder %s18, 0
      %p122 = por %p120, %p121
      %p123 = scmp.ne.s32.totalorder %s115, %s117
      %p124 = scmp.eq.s32.totalorder %s23, 1
      %p125 = por %p123, %p124
      %p126 = scmp.ne.s32.totalorder %s117, %s118
      %p127 = scmp.eq.s32.totalorder %s23, 0
      %p128 = por %p126, %p127
      %p129 = scmp.ne.s32.totalorder %s117, %s118
      %p130 = scmp.eq.s32.totalorder %s24, 1
      %p131 = por %p129, %p130
      %p133 = scmp.ne.s32.totalorder %s118, %s132
      %p134 = scmp.eq.s32.totalorder %s24, 0
      %p135 = por %p133, %p134
      %s136 = ssub.s32 %s18, %s25
      %p137 = scmp.eq.s32.totalorder %s136, 0
      %s139 = sadd.s32 %s138, 1
      %s140 = scalar_select %p137, %s138, %s139
      %p143 = pneg %p137
      %p144 = scmp.eq.s32.totalorder %s18, 1
      %p145 = por %p143, %p144
      %p146 = scmp.ne.s32.totalorder %s138, %s141
      %p147 = scmp.eq.s32.totalorder %s18, 0
      %p148 = por %p146, %p147
      %p149 = scmp.ne.s32.totalorder %s138, %s141
      %p150 = scmp.eq.s32.totalorder %s23, 1
      %p151 = por %p149, %p150
      %p152 = scmp.ne.s32.totalorder %s141, %s142
      %p153 = scmp.eq.s32.totalorder %s23, 0
      %p154 = por %p152, %p153
      %p155 = scmp.ne.s32.totalorder %s141, %s142
      %p156 = scmp.eq.s32.totalorder %s24, 1
      %p157 = por %p155, %p156
      %p159 = scmp.ne.s32.totalorder %s142, %s158
      %p160 = scmp.eq.s32.totalorder %s24, 0
      %p161 = por %p159, %p160
      %p162 = scmp.le.s32.totalorder 1, %s18
      %p163 = scmp.lt.s32.totalorder %s18, 3
      %p164 = pnand %p162, %p163
      %p165 = pneg %p164
      // Predicated region
      $region9: #{tpu_custom_call.1} parent=5 // pred_check
        _
      $region10: #{tpu_custom_call.1} parent=5 // pred_check_branch
        %167 = sbr.rel (%p164) target = $region12
      $region11: #{tpu_custom_call.1} parent=5 // pred_region
        %s168 = ssub.s32 %s18, 1
        // Predicated region
        $region13: #{tpu_custom_call.1} parent=11 // pred_check
          %p169 = pneg %p65
        $region14: #{tpu_custom_call.1} parent=11 // pred_check_branch
          %171 = sbr.rel (%p169) target = $region16
        $region15: #{tpu_custom_call.1} parent=11 // pred_region
          %s173 = ssub.s32 24576, 24576
          %174 = vsyncadd [#allocation6], %s173
          %s175 = sshll.u32 [#allocation5], 4
          %s176 = int_to_ptr.vmem [resolvable:$true] %s175
          %181 = dma.hbm_to_vmem [thread:$0]  %s1, 24576, %s176, [#allocation6], 256, 256, 16
        $region16: #{tpu_custom_call.1} parent=11 // pred_fallthru
          _
        // Predicated region
        $region17: #{tpu_custom_call.1} parent=11 // pred_check
          %p182 = pneg %p86
        $region18: #{tpu_custom_call.1} parent=11 // pred_check_branch
          %184 = sbr.rel (%p182) target = $region20
        $region19: #{tpu_custom_call.1} parent=11 // pred_region
          _
        $region20: #{tpu_custom_call.1} parent=11 // pred_fallthru
          _
        // Predicated region
        $region21: #{tpu_custom_call.1} parent=11 // pred_check
          %p185 = pneg %p107
        $region22: #{tpu_custom_call.1} parent=11 // pred_check_branch
          %187 = sbr.rel (%p185) target = $region24
        $region23: #{tpu_custom_call.1} parent=11 // pred_region
          %s189 = ssub.s32 16384, 16384
          %190 = vsyncadd [#allocation6], %s189
          %s191 = sshll.u32 [#allocation7], 4
          %s192 = int_to_ptr.vmem [resolvable:$true] %s191
          %197 = dma.hbm_to_vmem [thread:$0]  %s3, 16384, %s192, [#allocation6], 256, 256, 16
        $region24: #{tpu_custom_call.1} parent=11 // pred_fallthru
          _
        // Predicated region
        $region25: #{tpu_custom_call.1} parent=11 // pred_check
          %p198 = pneg %p128
        $region26: #{tpu_custom_call.1} parent=11 // pred_check_branch
          %200 = sbr.rel (%p198) target = $region28
        $region27: #{tpu_custom_call.1} parent=11 // pred_region
          _
        $region28: #{tpu_custom_call.1} parent=11 // pred_fallthru
          _
      $region12: #{tpu_custom_call.1} parent=5 // pred_fallthru
        _
      %p201 = scmp.lt.s32.totalorder %s18, 2
      // Predicated region
      $region29: #{tpu_custom_call.1} parent=5 // pred_check
        %p202 = pneg %p201
      $region30: #{tpu_custom_call.1} parent=5 // pred_check_branch
        %204 = sbr.rel (%p202) target = $region32
      $region31: #{tpu_custom_call.1} parent=5 // pred_region
        // Predicated region
        $region33: #{tpu_custom_call.1} parent=31 // pred_check
          %p205 = pneg %p38
        $region34: #{tpu_custom_call.1} parent=31 // pred_check_branch
          %207 = sbr.rel (%p205) target = $region36
        $region35: #{tpu_custom_call.1} parent=31 // pred_region
          %s208 = sand.u32 %s28, 1
          %s209 = scalar_lea.sflag [#allocation3], %s208
          %s210 = sand.u32 %s28, 1
          %s211 = smul.addr %s210, 192
          %s212 = scalar_lea.vmem [#allocation2], %s211
          %s213 = smul.u32 8, %s18
          %s215 = ssub.s32 3072, 3072
          %216 = vsyncadd %s209, %s215
          %s217 = smul.addr %s213, 6
          %s218 = smul.addr %s217, 64
          %s219 = scalar_lea.hbm %s0, %s218
          %s220 = sshll.u32 %s212, 4
          %s221 = int_to_ptr.vmem [resolvable:$true] %s220
          %226 = dma.hbm_to_vmem [thread:$0]  %s219, 3072, %s221, %s209, 384, 384, 24
        $region36: #{tpu_custom_call.1} parent=31 // pred_fallthru
          _
      $region32: #{tpu_custom_call.1} parent=5 // pred_fallthru
        _
      %p227 = scmp.le.s32.totalorder 1, %s18
      %p228 = scmp.lt.s32.totalorder %s18, 3
      %p229 = pnand %p227, %p228
      %p230 = pneg %p229
      // Predicated region
      $region37: #{tpu_custom_call.1} parent=5 // pred_check
        _
      $region38: #{tpu_custom_call.1} parent=5 // pred_check_branch
        %232 = sbr.rel (%p229) target = $region40
      $region39: #{tpu_custom_call.1} parent=5 // pred_region
        %s233 = ssub.s32 %s18, 1
        %s234 = sand.u32 %s31, 1
        %s235 = scalar_lea.sflag [#allocation3], %s234
        %s236 = sand.u32 %s31, 1
        %s237 = smul.addr %s236, 192
        %s238 = scalar_lea.vmem [#allocation2], %s237
        // Predicated region
        $region41: #{tpu_custom_call.1} parent=39 // pred_check
          %p239 = pneg %p44
        $region42: #{tpu_custom_call.1} parent=39 // pred_check_branch
          %241 = sbr.rel (%p239) target = $region44
        $region43: #{tpu_custom_call.1} parent=39 // pred_region
          %242 = dma.done %s235, 3072
        $region44: #{tpu_custom_call.1} parent=39 // pred_fallthru
          _
        // Predicated region
        $region45: #{tpu_custom_call.1} parent=39 // pred_check
          %p243 = pneg %p65
        $region46: #{tpu_custom_call.1} parent=39 // pred_check_branch
          %245 = sbr.rel (%p243) target = $region48
        $region47: #{tpu_custom_call.1} parent=39 // pred_region
          %246 = dma.done [#allocation6], 24576
        $region48: #{tpu_custom_call.1} parent=39 // pred_fallthru
          _
        // Predicated region
        $region49: #{tpu_custom_call.1} parent=39 // pred_check
          %p247 = pneg %p107
        $region50: #{tpu_custom_call.1} parent=39 // pred_check_branch
          %249 = sbr.rel (%p247) target = $region52
        $region51: #{tpu_custom_call.1} parent=39 // pred_region
          %250 = dma.done [#allocation6], 16384
        $region52: #{tpu_custom_call.1} parent=39 // pred_fallthru
          _
        %s251 = sand.u32 %s31, 1
        %s252 = scalar_lea.sflag [#allocation3], %s251
        %s253 = sand.u32 %s31, 1
        %s254 = smul.addr %s253, 192
        %s255 = scalar_lea.vmem [#allocation2], %s254
        %p256 = pneg %p44
        %p257 = pneg %p41
        %p258 = pneg %p65
        %p259 = pneg %p62
        %p260 = pneg %p86
        %p261 = pneg %p83
        %p262 = pneg %p107
        %p263 = pneg %p104
        %p264 = pneg %p128
        %p265 = pneg %p125
        %p266 = pneg %p154
        %p267 = pneg %p151
        %s268 = sand.u32 %s141, 1
        %s269 = scalar_lea.sflag [#allocation4], %s268
        %s270 = sand.u32 %s141, 1
        %s271 = smul.addr %s270, 128
        %s272 = scalar_lea.vmem [#allocation8], %s271
        %s273 = smul.u32 8, %s23
        %s274 = smul.u32 8, %s23
        %v275 = vld [vmem:[%s238] sm:$0xff]
        %v276 = vld [vmem:[%s238 + $0x8] sm:$0xff]
        %v277 = vld [vmem:[%s238 + $0x10] sm:$0xff]
        %v278 = vld [vmem:[%s238 + $0x18] sm:$0xff]
        %v279 = vld [vmem:[%s238 + $0x20] sm:$0xff]
        %v280 = vld [vmem:[%s238 + $0x28] sm:$0xff]
        %v281 = vld [vmem:[%s238 + $0x30] sm:$0xff]
        %v282 = vld [vmem:[%s238 + $0x38] sm:$0xff]
        %v283 = vld [vmem:[%s238 + $0x40] sm:$0xff]
        %v284 = vld [vmem:[%s238 + $0x48] sm:$0xff]
        %v285 = vld [vmem:[%s238 + $0x50] sm:$0xff]
        %v286 = vld [vmem:[%s238 + $0x58] sm:$0xff]
        %v287 = vld [vmem:[%s238 + $0x60] sm:$0xff]
        %v288 = vld [vmem:[%s238 + $0x68] sm:$0xff]
        %v289 = vld [vmem:[%s238 + $0x70] sm:$0xff]
        %v290 = vld [vmem:[%s238 + $0x78] sm:$0xff]
        %v291 = vld [vmem:[%s238 + $0x80] sm:$0xff]
        %v292 = vld [vmem:[%s238 + $0x88] sm:$0xff]
        %v293 = vld [vmem:[%s238 + $0x90] sm:$0xff]
        %v294 = vld [vmem:[%s238 + $0x98] sm:$0xff]
        %v295 = vld [vmem:[%s238 + $0xa0] sm:$0xff]
        %v296 = vld [vmem:[%s238 + $0xa8] sm:$0xff]
        %v297 = vld [vmem:[%s238 + $0xb0] sm:$0xff]
        %v298 = vld [vmem:[%s238 + $0xb8] sm:$0xff]
        %v299 = vld [vmem:[#allocation5] sm:$0xff]
        %v300 = vld [vmem:[#allocation5 + $0x8] sm:$0xff]
        %v301 = vld [vmem:[#allocation5 + $0x10] sm:$0xff]
        %v302 = vld [vmem:[#allocation5 + $0x18] sm:$0xff]
        %v303 = vld [vmem:[#allocation5 + $0x20] sm:$0xff]
        %v304 = vld [vmem:[#allocation5 + $0x28] sm:$0xff]
        %v305 = vld [vmem:[#allocation5 + $0x30] sm:$0xff]
        %v306 = vld [vmem:[#allocation5 + $0x38] sm:$0xff]
        %v307 = vld [vmem:[#allocation5 + $0x40] sm:$0xff]
        %v308 = vld [vmem:[#allocation5 + $0x48] sm:$0xff]
        %v309 = vld [vmem:[#allocation5 + $0x50] sm:$0xff]
        %v310 = vld [vmem:[#allocation5 + $0x58] sm:$0xff]
        %v311 = vld [vmem:[#allocation5 + $0x60] sm:$0xff]
        %v312 = vld [vmem:[#allocation5 + $0x68] sm:$0xff]
        %v313 = vld [vmem:[#allocation5 + $0x70] sm:$0xff]
        %v314 = vld [vmem:[#allocation5 + $0x78] sm:$0xff]
        %v315 = vld [vmem:[#allocation5 + $0x80] sm:$0xff]
        %v316 = vld [vmem:[#allocation5 + $0x88] sm:$0xff]
        %v317 = vld [vmem:[#allocation5 + $0x90] sm:$0xff]
        %v318 = vld [vmem:[#allocation5 + $0x98] sm:$0xff]
        %v319 = vld [vmem:[#allocation5 + $0xa0] sm:$0xff]
        %v320 = vld [vmem:[#allocation5 + $0xa8] sm:$0xff]
        %v321 = vld [vmem:[#allocation5 + $0xb0] sm:$0xff]
        %v322 = vld [vmem:[#allocation5 + $0xb8] sm:$0xff]
        %v323 = vld [vmem:[#allocation5 + $0xc0] sm:$0xff]
        %v324 = vld [vmem:[#allocation5 + $0xc8] sm:$0xff]
        %v325 = vld [vmem:[#allocation5 + $0xd0] sm:$0xff]
        %v326 = vld [vmem:[#allocation5 + $0xd8] sm:$0xff]
        %v327 = vld [vmem:[#allocation5 + $0xe0] sm:$0xff]
        %v328 = vld [vmem:[#allocation5 + $0xe8] sm:$0xff]
        %v329 = vld [vmem:[#allocation5 + $0xf0] sm:$0xff]
        %v330 = vld [vmem:[#allocation5 + $0xf8] sm:$0xff]
        %v331 = vld [vmem:[#allocation5 + $0x100] sm:$0xff]
        %v332 = vld [vmem:[#allocation5 + $0x108] sm:$0xff]
        %v333 = vld [vmem:[#allocation5 + $0x110] sm:$0xff]
        %v334 = vld [vmem:[#allocation5 + $0x118] sm:$0xff]
        %v335 = vld [vmem:[#allocation5 + $0x120] sm:$0xff]
        %v336 = vld [vmem:[#allocation5 + $0x128] sm:$0xff]
        %v337 = vld [vmem:[#allocation5 + $0x130] sm:$0xff]
        %v338 = vld [vmem:[#allocation5 + $0x138] sm:$0xff]
        %v339 = vld [vmem:[#allocation5 + $0x140] sm:$0xff]
        %v340 = vld [vmem:[#allocation5 + $0x148] sm:$0xff]
        %v341 = vld [vmem:[#allocation5 + $0x150] sm:$0xff]
        %v342 = vld [vmem:[#allocation5 + $0x158] sm:$0xff]
        %v343 = vld [vmem:[#allocation5 + $0x160] sm:$0xff]
        %v344 = vld [vmem:[#allocation5 + $0x168] sm:$0xff]
        %v345 = vld [vmem:[#allocation5 + $0x170] sm:$0xff]
        %v346 = vld [vmem:[#allocation5 + $0x178] sm:$0xff]
        %v347 = vld [vmem:[#allocation5 + $0x180] sm:$0xff]
        %v348 = vld [vmem:[#allocation5 + $0x188] sm:$0xff]
        %v349 = vld [vmem:[#allocation5 + $0x190] sm:$0xff]
        %v350 = vld [vmem:[#allocation5 + $0x198] sm:$0xff]
        %v351 = vld [vmem:[#allocation5 + $0x1a0] sm:$0xff]
        %v352 = vld [vmem:[#allocation5 + $0x1a8] sm:$0xff]
        %v353 = vld [vmem:[#allocation5 + $0x1b0] sm:$0xff]
        %v354 = vld [vmem:[#allocation5 + $0x1b8] sm:$0xff]
        %v355 = vld [vmem:[#allocation5 + $0x1c0] sm:$0xff]
        %v356 = vld [vmem:[#allocation5 + $0x1c8] sm:$0xff]
        %v357 = vld [vmem:[#allocation5 + $0x1d0] sm:$0xff]
        %v358 = vld [vmem:[#allocation5 + $0x1d8] sm:$0xff]
        %v359 = vld [vmem:[#allocation5 + $0x1e0] sm:$0xff]
        %v360 = vld [vmem:[#allocation5 + $0x1e8] sm:$0xff]
        %v361 = vld [vmem:[#allocation5 + $0x1f0] sm:$0xff]
        %v362 = vld [vmem:[#allocation5 + $0x1f8] sm:$0xff]
        %v363 = vld [vmem:[#allocation5 + $0x200] sm:$0xff]
        %v364 = vld [vmem:[#allocation5 + $0x208] sm:$0xff]
        %v365 = vld [vmem:[#allocation5 + $0x210] sm:$0xff]
        %v366 = vld [vmem:[#allocation5 + $0x218] sm:$0xff]
        %v367 = vld [vmem:[#allocation5 + $0x220] sm:$0xff]
        %v368 = vld [vmem:[#allocation5 + $0x228] sm:$0xff]
        %v369 = vld [vmem:[#allocation5 + $0x230] sm:$0xff]
        %v370 = vld [vmem:[#allocation5 + $0x238] sm:$0xff]
        %v371 = vld [vmem:[#allocation5 + $0x240] sm:$0xff]
        %v372 = vld [vmem:[#allocation5 + $0x248] sm:$0xff]
        %v373 = vld [vmem:[#allocation5 + $0x250] sm:$0xff]
        %v374 = vld [vmem:[#allocation5 + $0x258] sm:$0xff]
        %v375 = vld [vmem:[#allocation5 + $0x260] sm:$0xff]
        %v376 = vld [vmem:[#allocation5 + $0x268] sm:$0xff]
        %v377 = vld [vmem:[#allocation5 + $0x270] sm:$0xff]
        %v378 = vld [vmem:[#allocation5 + $0x278] sm:$0xff]
        %v379 = vld [vmem:[#allocation5 + $0x280] sm:$0xff]
        %v380 = vld [vmem:[#allocation5 + $0x288] sm:$0xff]
        %v381 = vld [vmem:[#allocation5 + $0x290] sm:$0xff]
        %v382 = vld [vmem:[#allocation5 + $0x298] sm:$0xff]
        %v383 = vld [vmem:[#allocation5 + $0x2a0] sm:$0xff]
        %v384 = vld [vmem:[#allocation5 + $0x2a8] sm:$0xff]
        %v385 = vld [vmem:[#allocation5 + $0x2b0] sm:$0xff]
        %v386 = vld [vmem:[#allocation5 + $0x2b8] sm:$0xff]
        %v387 = vld [vmem:[#allocation5 + $0x2c0] sm:$0xff]
        %v388 = vld [vmem:[#allocation5 + $0x2c8] sm:$0xff]
        %v389 = vld [vmem:[#allocation5 + $0x2d0] sm:$0xff]
        %v390 = vld [vmem:[#allocation5 + $0x2d8] sm:$0xff]
        %v391 = vld [vmem:[#allocation5 + $0x2e0] sm:$0xff]
        %v392 = vld [vmem:[#allocation5 + $0x2e8] sm:$0xff]
        %v393 = vld [vmem:[#allocation5 + $0x2f0] sm:$0xff]
        %v394 = vld [vmem:[#allocation5 + $0x2f8] sm:$0xff]
        %v395 = vld [vmem:[#allocation5 + $0x300] sm:$0xff]
        %v396 = vld [vmem:[#allocation5 + $0x308] sm:$0xff]
        %v397 = vld [vmem:[#allocation5 + $0x310] sm:$0xff]
        %v398 = vld [vmem:[#allocation5 + $0x318] sm:$0xff]
        %v399 = vld [vmem:[#allocation5 + $0x320] sm:$0xff]
        %v400 = vld [vmem:[#allocation5 + $0x328] sm:$0xff]
        %v401 = vld [vmem:[#allocation5 + $0x330] sm:$0xff]
        %v402 = vld [vmem:[#allocation5 + $0x338] sm:$0xff]
        %v403 = vld [vmem:[#allocation5 + $0x340] sm:$0xff]
        %v404 = vld [vmem:[#allocation5 + $0x348] sm:$0xff]
        %v405 = vld [vmem:[#allocation5 + $0x350] sm:$0xff]
        %v406 = vld [vmem:[#allocation5 + $0x358] sm:$0xff]
        %v407 = vld [vmem:[#allocation5 + $0x360] sm:$0xff]
        %v408 = vld [vmem:[#allocation5 + $0x368] sm:$0xff]
        %v409 = vld [vmem:[#allocation5 + $0x370] sm:$0xff]
        %v410 = vld [vmem:[#allocation5 + $0x378] sm:$0xff]
        %v411 = vld [vmem:[#allocation5 + $0x380] sm:$0xff]
        %v412 = vld [vmem:[#allocation5 + $0x388] sm:$0xff]
        %v413 = vld [vmem:[#allocation5 + $0x390] sm:$0xff]
        %v414 = vld [vmem:[#allocation5 + $0x398] sm:$0xff]
        %v415 = vld [vmem:[#allocation5 + $0x3a0] sm:$0xff]
        %v416 = vld [vmem:[#allocation5 + $0x3a8] sm:$0xff]
        %v417 = vld [vmem:[#allocation5 + $0x3b0] sm:$0xff]
        %v418 = vld [vmem:[#allocation5 + $0x3b8] sm:$0xff]
        %v419 = vld [vmem:[#allocation5 + $0x3c0] sm:$0xff]
        %v420 = vld [vmem:[#allocation5 + $0x3c8] sm:$0xff]
        %v421 = vld [vmem:[#allocation5 + $0x3d0] sm:$0xff]
        %v422 = vld [vmem:[#allocation5 + $0x3d8] sm:$0xff]
        %v423 = vld [vmem:[#allocation5 + $0x3e0] sm:$0xff]
        %v424 = vld [vmem:[#allocation5 + $0x3e8] sm:$0xff]
        %v425 = vld [vmem:[#allocation5 + $0x3f0] sm:$0xff]
        %v426 = vld [vmem:[#allocation5 + $0x3f8] sm:$0xff]
        %v427 = vld [vmem:[#allocation5 + $0x400] sm:$0xff]
        %v428 = vld [vmem:[#allocation5 + $0x408] sm:$0xff]
        %v429 = vld [vmem:[#allocation5 + $0x410] sm:$0xff]
        %v430 = vld [vmem:[#allocation5 + $0x418] sm:$0xff]
        %v431 = vld [vmem:[#allocation5 + $0x420] sm:$0xff]
        %v432 = vld [vmem:[#allocation5 + $0x428] sm:$0xff]
        %v433 = vld [vmem:[#allocation5 + $0x430] sm:$0xff]
        %v434 = vld [vmem:[#allocation5 + $0x438] sm:$0xff]
        %v435 = vld [vmem:[#allocation5 + $0x440] sm:$0xff]
        %v436 = vld [vmem:[#allocation5 + $0x448] sm:$0xff]
        %v437 = vld [vmem:[#allocation5 + $0x450] sm:$0xff]
        %v438 = vld [vmem:[#allocation5 + $0x458] sm:$0xff]
        %v439 = vld [vmem:[#allocation5 + $0x460] sm:$0xff]
        %v440 = vld [vmem:[#allocation5 + $0x468] sm:$0xff]
        %v441 = vld [vmem:[#allocation5 + $0x470] sm:$0xff]
        %v442 = vld [vmem:[#allocation5 + $0x478] sm:$0xff]
        %v443 = vld [vmem:[#allocation5 + $0x480] sm:$0xff]
        %v444 = vld [vmem:[#allocation5 + $0x488] sm:$0xff]
        %v445 = vld [vmem:[#allocation5 + $0x490] sm:$0xff]
        %v446 = vld [vmem:[#allocation5 + $0x498] sm:$0xff]
        %v447 = vld [vmem:[#allocation5 + $0x4a0] sm:$0xff]
        %v448 = vld [vmem:[#allocation5 + $0x4a8] sm:$0xff]
        %v449 = vld [vmem:[#allocation5 + $0x4b0] sm:$0xff]
        %v450 = vld [vmem:[#allocation5 + $0x4b8] sm:$0xff]
        %v451 = vld [vmem:[#allocation5 + $0x4c0] sm:$0xff]
        %v452 = vld [vmem:[#allocation5 + $0x4c8] sm:$0xff]
        %v453 = vld [vmem:[#allocation5 + $0x4d0] sm:$0xff]
        %v454 = vld [vmem:[#allocation5 + $0x4d8] sm:$0xff]
        %v455 = vld [vmem:[#allocation5 + $0x4e0] sm:$0xff]
        %v456 = vld [vmem:[#allocation5 + $0x4e8] sm:$0xff]
        %v457 = vld [vmem:[#allocation5 + $0x4f0] sm:$0xff]
        %v458 = vld [vmem:[#allocation5 + $0x4f8] sm:$0xff]
        %v459 = vld [vmem:[#allocation5 + $0x500] sm:$0xff]
        %v460 = vld [vmem:[#allocation5 + $0x508] sm:$0xff]
        %v461 = vld [vmem:[#allocation5 + $0x510] sm:$0xff]
        %v462 = vld [vmem:[#allocation5 + $0x518] sm:$0xff]
        %v463 = vld [vmem:[#allocation5 + $0x520] sm:$0xff]
        %v464 = vld [vmem:[#allocation5 + $0x528] sm:$0xff]
        %v465 = vld [vmem:[#allocation5 + $0x530] sm:$0xff]
        %v466 = vld [vmem:[#allocation5 + $0x538] sm:$0xff]
        %v467 = vld [vmem:[#allocation5 + $0x540] sm:$0xff]
        %v468 = vld [vmem:[#allocation5 + $0x548] sm:$0xff]
        %v469 = vld [vmem:[#allocation5 + $0x550] sm:$0xff]
        %v470 = vld [vmem:[#allocation5 + $0x558] sm:$0xff]
        %v471 = vld [vmem:[#allocation5 + $0x560] sm:$0xff]
        %v472 = vld [vmem:[#allocation5 + $0x568] sm:$0xff]
        %v473 = vld [vmem:[#allocation5 + $0x570] sm:$0xff]
        %v474 = vld [vmem:[#allocation5 + $0x578] sm:$0xff]
        %v475 = vld [vmem:[#allocation5 + $0x580] sm:$0xff]
        %v476 = vld [vmem:[#allocation5 + $0x588] sm:$0xff]
        %v477 = vld [vmem:[#allocation5 + $0x590] sm:$0xff]
        %v478 = vld [vmem:[#allocation5 + $0x598] sm:$0xff]
        %v479 = vld [vmem:[#allocation5 + $0x5a0] sm:$0xff]
        %v480 = vld [vmem:[#allocation5 + $0x5a8] sm:$0xff]
        %v481 = vld [vmem:[#allocation5 + $0x5b0] sm:$0xff]
        %v482 = vld [vmem:[#allocation5 + $0x5b8] sm:$0xff]
        %v483 = vld [vmem:[#allocation5 + $0x5c0] sm:$0xff]
        %v484 = vld [vmem:[#allocation5 + $0x5c8] sm:$0xff]
        %v485 = vld [vmem:[#allocation5 + $0x5d0] sm:$0xff]
        %v486 = vld [vmem:[#allocation5 + $0x5d8] sm:$0xff]
        %v487 = vld [vmem:[#allocation5 + $0x5e0] sm:$0xff]
        %v488 = vld [vmem:[#allocation5 + $0x5e8] sm:$0xff]
        %v489 = vld [vmem:[#allocation5 + $0x5f0] sm:$0xff]
        %v490 = vld [vmem:[#allocation5 + $0x5f8] sm:$0xff]
        %v491 = vld [vmem:[%s2] sm:$0xf]
        %v493 = vlaneseq
        %v494 = vshrl.u32 %v493, 7
        %v495 = vsub.s32 0, %v494
        %v496 = vrot.slane %v491, %v495
        %v497 = vlaneseq
        %v498 = vshrl.u32 %v497, 7
        %v499 = vsub.s32 1, %v498
        %v500 = vrot.slane %v491, %v499
        %v501 = vlaneseq
        %v502 = vshrl.u32 %v501, 7
        %v503 = vsub.s32 2, %v502
        %v504 = vrot.slane %v491, %v503
        %v505 = vlaneseq
        %v506 = vshrl.u32 %v505, 7
        %v507 = vsub.s32 3, %v506
        %v508 = vrot.slane %v491, %v507
        %v537 = vunpack.c.l.b16 %v275
        %v538 = vunpack.c.h.b16 %v275
        %v539 = vunpack.c.l.b16 %v276
        %v540 = vunpack.c.h.b16 %v276
        %v541 = vunpack.c.l.b16 %v277
        %v542 = vunpack.c.h.b16 %v277
        %v543 = vunpack.c.l.b16 %v278
        %v544 = vunpack.c.h.b16 %v278
        %v545 = vunpack.c.l.b16 %v279
        %v546 = vunpack.c.h.b16 %v279
        %v547 = vunpack.c.l.b16 %v280
        %v548 = vunpack.c.h.b16 %v280
        %v549 = vunpack.c.l.b16 %v281
        %v550 = vunpack.c.h.b16 %v281
        %v551 = vunpack.c.l.b16 %v282
        %v552 = vunpack.c.h.b16 %v282
        %v553 = vunpack.c.l.b16 %v283
        %v554 = vunpack.c.h.b16 %v283
        %v555 = vunpack.c.l.b16 %v284
        %v556 = vunpack.c.h.b16 %v284
        %v557 = vunpack.c.l.b16 %v285
        %v558 = vunpack.c.h.b16 %v285
        %v559 = vunpack.c.l.b16 %v286
        %v560 = vunpack.c.h.b16 %v286
        %v561 = vunpack.c.l.b16 %v287
        %v562 = vunpack.c.h.b16 %v287
        %v563 = vunpack.c.l.b16 %v288
        %v564 = vunpack.c.h.b16 %v288
        %v565 = vunpack.c.l.b16 %v289
        %v566 = vunpack.c.h.b16 %v289
        %v567 = vunpack.c.l.b16 %v290
        %v568 = vunpack.c.h.b16 %v290
        %v569 = vunpack.c.l.b16 %v291
        %v570 = vunpack.c.h.b16 %v291
        %v571 = vunpack.c.l.b16 %v292
        %v572 = vunpack.c.h.b16 %v292
        %v573 = vunpack.c.l.b16 %v293
        %v574 = vunpack.c.h.b16 %v293
        %v575 = vunpack.c.l.b16 %v294
        %v576 = vunpack.c.h.b16 %v294
        %v577 = vunpack.c.l.b16 %v295
        %v578 = vunpack.c.h.b16 %v295
        %v579 = vunpack.c.l.b16 %v296
        %v580 = vunpack.c.h.b16 %v296
        %v581 = vunpack.c.l.b16 %v297
        %v582 = vunpack.c.h.b16 %v297
        %v583 = vunpack.c.l.b16 %v298
        %v584 = vunpack.c.h.b16 %v298
        %v585 = vpack.c.b16 %v543, %v537
        %v586 = vpack.c.b16 %v544, %v538
        %v587 = vpack.c.b16 %v545, %v539
        %v588 = vpack.c.b16 %v546, %v540
        %v589 = vpack.c.b16 %v547, %v541
        %v590 = vpack.c.b16 %v548, %v542
        %v591 = vpack.c.b16 %v555, %v549
        %v592 = vpack.c.b16 %v556, %v550
        %v593 = vpack.c.b16 %v557, %v551
        %v594 = vpack.c.b16 %v558, %v552
        %v595 = vpack.c.b16 %v559, %v553
        %v596 = vpack.c.b16 %v560, %v554
        %v597 = vpack.c.b16 %v567, %v561
        %v598 = vpack.c.b16 %v568, %v562
        %v599 = vpack.c.b16 %v569, %v563
        %v600 = vpack.c.b16 %v570, %v564
        %v601 = vpack.c.b16 %v571, %v565
        %v602 = vpack.c.b16 %v572, %v566
        %v603 = vpack.c.b16 %v579, %v573
        %v604 = vpack.c.b16 %v580, %v574
        %v605 = vpack.c.b16 %v581, %v575
        %v606 = vpack.c.b16 %v582, %v576
        %v607 = vpack.c.b16 %v583, %v577
        %v608 = vpack.c.b16 %v584, %v578
        %v825 = vunpack.c.l.b16 %v299
        %v826 = vunpack.c.h.b16 %v299
        %v827 = vunpack.c.l.b16 %v300
        %v828 = vunpack.c.h.b16 %v300
        %v829 = vunpack.c.l.b16 %v301
        %v830 = vunpack.c.h.b16 %v301
        %v831 = vunpack.c.l.b16 %v302
        %v832 = vunpack.c.h.b16 %v302
        %v833 = vunpack.c.l.b16 %v303
        %v834 = vunpack.c.h.b16 %v303
        %v835 = vunpack.c.l.b16 %v304
        %v836 = vunpack.c.h.b16 %v304
        %v837 = vunpack.c.l.b16 %v305
        %v838 = vunpack.c.h.b16 %v305
        %v839 = vunpack.c.l.b16 %v306
        %v840 = vunpack.c.h.b16 %v306
        %v841 = vunpack.c.l.b16 %v307
        %v842 = vunpack.c.h.b16 %v307
        %v843 = vunpack.c.l.b16 %v308
        %v844 = vunpack.c.h.b16 %v308
        %v845 = vunpack.c.l.b16 %v309
        %v846 = vunpack.c.h.b16 %v309
        %v847 = vunpack.c.l.b16 %v310
        %v848 = vunpack.c.h.b16 %v310
        %v849 = vunpack.c.l.b16 %v311
        %v850 = vunpack.c.h.b16 %v311
        %v851 = vunpack.c.l.b16 %v312
        %v852 = vunpack.c.h.b16 %v312
        %v853 = vunpack.c.l.b16 %v313
        %v854 = vunpack.c.h.b16 %v313
        %v855 = vunpack.c.l.b16 %v314
        %v856 = vunpack.c.h.b16 %v314
        %v857 = vunpack.c.l.b16 %v315
        %v858 = vunpack.c.h.b16 %v315
        %v859 = vunpack.c.l.b16 %v316
        %v860 = vunpack.c.h.b16 %v316
        %v861 = vunpack.c.l.b16 %v317
        %v862 = vunpack.c.h.b16 %v317
        %v863 = vunpack.c.l.b16 %v318
        %v864 = vunpack.c.h.b16 %v318
        %v865 = vunpack.c.l.b16 %v319
        %v866 = vunpack.c.h.b16 %v319
        %v867 = vunpack.c.l.b16 %v320
        %v868 = vunpack.c.h.b16 %v320
        %v869 = vunpack.c.l.b16 %v321
        %v870 = vunpack.c.h.b16 %v321
        %v871 = vunpack.c.l.b16 %v322
        %v872 = vunpack.c.h.b16 %v322
        %v873 = vunpack.c.l.b16 %v323
        %v874 = vunpack.c.h.b16 %v323
        %v875 = vunpack.c.l.b16 %v324
        %v876 = vunpack.c.h.b16 %v324
        %v877 = vunpack.c.l.b16 %v325
        %v878 = vunpack.c.h.b16 %v325
        %v879 = vunpack.c.l.b16 %v326
        %v880 = vunpack.c.h.b16 %v326
        %v881 = vunpack.c.l.b16 %v327
        %v882 = vunpack.c.h.b16 %v327
        %v883 = vunpack.c.l.b16 %v328
        %v884 = vunpack.c.h.b16 %v328
        %v885 = vunpack.c.l.b16 %v329
        %v886 = vunpack.c.h.b16 %v329
        %v887 = vunpack.c.l.b16 %v330
        %v888 = vunpack.c.h.b16 %v330
        %v889 = vunpack.c.l.b16 %v331
        %v890 = vunpack.c.h.b16 %v331
        %v891 = vunpack.c.l.b16 %v332
        %v892 = vunpack.c.h.b16 %v332
        %v893 = vunpack.c.l.b16 %v333
        %v894 = vunpack.c.h.b16 %v333
        %v895 = vunpack.c.l.b16 %v334
        %v896 = vunpack.c.h.b16 %v334
        %v897 = vunpack.c.l.b16 %v335
        %v898 = vunpack.c.h.b16 %v335
        %v899 = vunpack.c.l.b16 %v336
        %v900 = vunpack.c.h.b16 %v336
        %v901 = vunpack.c.l.b16 %v337
        %v902 = vunpack.c.h.b16 %v337
        %v903 = vunpack.c.l.b16 %v338
        %v904 = vunpack.c.h.b16 %v338
        %v905 = vunpack.c.l.b16 %v339
        %v906 = vunpack.c.h.b16 %v339
        %v907 = vunpack.c.l.b16 %v340
        %v908 = vunpack.c.h.b16 %v340
        %v909 = vunpack.c.l.b16 %v341
        %v910 = vunpack.c.h.b16 %v341
        %v911 = vunpack.c.l.b16 %v342
        %v912 = vunpack.c.h.b16 %v342
        %v913 = vunpack.c.l.b16 %v343
        %v914 = vunpack.c.h.b16 %v343
        %v915 = vunpack.c.l.b16 %v344
        %v916 = vunpack.c.h.b16 %v344
        %v917 = vunpack.c.l.b16 %v345
        %v918 = vunpack.c.h.b16 %v345
        %v919 = vunpack.c.l.b16 %v346
        %v920 = vunpack.c.h.b16 %v346
        %v921 = vunpack.c.l.b16 %v347
        %v922 = vunpack.c.h.b16 %v347
        %v923 = vunpack.c.l.b16 %v348
        %v924 = vunpack.c.h.b16 %v348
        %v925 = vunpack.c.l.b16 %v349
        %v926 = vunpack.c.h.b16 %v349
        %v927 = vunpack.c.l.b16 %v350
        %v928 = vunpack.c.h.b16 %v350
        %v929 = vunpack.c.l.b16 %v351
        %v930 = vunpack.c.h.b16 %v351
        %v931 = vunpack.c.l.b16 %v352
        %v932 = vunpack.c.h.b16 %v352
        %v933 = vunpack.c.l.b16 %v353
        %v934 = vunpack.c.h.b16 %v353
        %v935 = vunpack.c.l.b16 %v354
        %v936 = vunpack.c.h.b16 %v354
        %v937 = vunpack.c.l.b16 %v355
        %v938 = vunpack.c.h.b16 %v355
        %v939 = vunpack.c.l.b16 %v356
        %v940 = vunpack.c.h.b16 %v356
        %v941 = vunpack.c.l.b16 %v357
        %v942 = vunpack.c.h.b16 %v357
        %v943 = vunpack.c.l.b16 %v358
        %v944 = vunpack.c.h.b16 %v358
        %v945 = vunpack.c.l.b16 %v359
        %v946 = vunpack.c.h.b16 %v359
        %v947 = vunpack.c.l.b16 %v360
        %v948 = vunpack.c.h.b16 %v360
        %v949 = vunpack.c.l.b16 %v361
        %v950 = vunpack.c.h.b16 %v361
        %v951 = vunpack.c.l.b16 %v362
        %v952 = vunpack.c.h.b16 %v362
        %v953 = vunpack.c.l.b16 %v363
        %v954 = vunpack.c.h.b16 %v363
        %v955 = vunpack.c.l.b16 %v364
        %v956 = vunpack.c.h.b16 %v364
        %v957 = vunpack.c.l.b16 %v365
        %v958 = vunpack.c.h.b16 %v365
        %v959 = vunpack.c.l.b16 %v366
        %v960 = vunpack.c.h.b16 %v366
        %v961 = vunpack.c.l.b16 %v367
        %v962 = vunpack.c.h.b16 %v367
        %v963 = vunpack.c.l.b16 %v368
        %v964 = vunpack.c.h.b16 %v368
        %v965 = vunpack.c.l.b16 %v369
        %v966 = vunpack.c.h.b16 %v369
        %v967 = vunpack.c.l.b16 %v370
        %v968 = vunpack.c.h.b16 %v370
        %v969 = vunpack.c.l.b16 %v371
        %v970 = vunpack.c.h.b16 %v371
        %v971 = vunpack.c.l.b16 %v372
        %v972 = vunpack.c.h.b16 %v372
        %v973 = vunpack.c.l.b16 %v373
        %v974 = vunpack.c.h.b16 %v373
        %v975 = vunpack.c.l.b16 %v374
        %v976 = vunpack.c.h.b16 %v374
        %v977 = vunpack.c.l.b16 %v375
        %v978 = vunpack.c.h.b16 %v375
        %v979 = vunpack.c.l.b16 %v376
        %v980 = vunpack.c.h.b16 %v376
        %v981 = vunpack.c.l.b16 %v377
        %v982 = vunpack.c.h.b16 %v377
        %v983 = vunpack.c.l.b16 %v378
        %v984 = vunpack.c.h.b16 %v378
        %v985 = vunpack.c.l.b16 %v379
        %v986 = vunpack.c.h.b16 %v379
        %v987 = vunpack.c.l.b16 %v380
        %v988 = vunpack.c.h.b16 %v380
        %v989 = vunpack.c.l.b16 %v381
        %v990 = vunpack.c.h.b16 %v381
        %v991 = vunpack.c.l.b16 %v382
        %v992 = vunpack.c.h.b16 %v382
        %v993 = vunpack.c.l.b16 %v383
        %v994 = vunpack.c.h.b16 %v383
        %v995 = vunpack.c.l.b16 %v384
        %v996 = vunpack.c.h.b16 %v384
        %v997 = vunpack.c.l.b16 %v385
        %v998 = vunpack.c.h.b16 %v385
        %v999 = vunpack.c.l.b16 %v386
        %v1000 = vunpack.c.h.b16 %v386
        %v1001 = vunpack.c.l.b16 %v387
        %v1002 = vunpack.c.h.b16 %v387
        %v1003 = vunpack.c.l.b16 %v388
        %v1004 = vunpack.c.h.b16 %v388
        %v1005 = vunpack.c.l.b16 %v389
        %v1006 = vunpack.c.h.b16 %v389
        %v1007 = vunpack.c.l.b16 %v390
        %v1008 = vunpack.c.h.b16 %v390
        %v1009 = vunpack.c.l.b16 %v391
        %v1010 = vunpack.c.h.b16 %v391
        %v1011 = vunpack.c.l.b16 %v392
        %v1012 = vunpack.c.h.b16 %v392
        %v1013 = vunpack.c.l.b16 %v393
        %v1014 = vunpack.c.h.b16 %v393
        %v1015 = vunpack.c.l.b16 %v394
        %v1016 = vunpack.c.h.b16 %v394
        %v1017 = vunpack.c.l.b16 %v395
        %v1018 = vunpack.c.h.b16 %v395
        %v1019 = vunpack.c.l.b16 %v396
        %v1020 = vunpack.c.h.b16 %v396
        %v1021 = vunpack.c.l.b16 %v397
        %v1022 = vunpack.c.h.b16 %v397
        %v1023 = vunpack.c.l.b16 %v398
        %v1024 = vunpack.c.h.b16 %v398
        %v1025 = vunpack.c.l.b16 %v399
        %v1026 = vunpack.c.h.b16 %v399
        %v1027 = vunpack.c.l.b16 %v400
        %v1028 = vunpack.c.h.b16 %v400
        %v1029 = vunpack.c.l.b16 %v401
        %v1030 = vunpack.c.h.b16 %v401
        %v1031 = vunpack.c.l.b16 %v402
        %v1032 = vunpack.c.h.b16 %v402
        %v1033 = vunpack.c.l.b16 %v403
        %v1034 = vunpack.c.h.b16 %v403
        %v1035 = vunpack.c.l.b16 %v404
        %v1036 = vunpack.c.h.b16 %v404
        %v1037 = vunpack.c.l.b16 %v405
        %v1038 = vunpack.c.h.b16 %v405
        %v1039 = vunpack.c.l.b16 %v406
        %v1040 = vunpack.c.h.b16 %v406
        %v1041 = vunpack.c.l.b16 %v407
        %v1042 = vunpack.c.h.b16 %v407
        %v1043 = vunpack.c.l.b16 %v408
        %v1044 = vunpack.c.h.b16 %v408
        %v1045 = vunpack.c.l.b16 %v409
        %v1046 = vunpack.c.h.b16 %v409
        %v1047 = vunpack.c.l.b16 %v410
        %v1048 = vunpack.c.h.b16 %v410
        %v1049 = vunpack.c.l.b16 %v411
        %v1050 = vunpack.c.h.b16 %v411
        %v1051 = vunpack.c.l.b16 %v412
        %v1052 = vunpack.c.h.b16 %v412
        %v1053 = vunpack.c.l.b16 %v413
        %v1054 = vunpack.c.h.b16 %v413
        %v1055 = vunpack.c.l.b16 %v414
        %v1056 = vunpack.c.h.b16 %v414
        %v1057 = vunpack.c.l.b16 %v415
        %v1058 = vunpack.c.h.b16 %v415
        %v1059 = vunpack.c.l.b16 %v416
        %v1060 = vunpack.c.h.b16 %v416
        %v1061 = vunpack.c.l.b16 %v417
        %v1062 = vunpack.c.h.b16 %v417
        %v1063 = vunpack.c.l.b16 %v418
        %v1064 = vunpack.c.h.b16 %v418
        %v1065 = vunpack.c.l.b16 %v419
        %v1066 = vunpack.c.h.b16 %v419
        %v1067 = vunpack.c.l.b16 %v420
        %v1068 = vunpack.c.h.b16 %v420
        %v1069 = vunpack.c.l.b16 %v421
        %v1070 = vunpack.c.h.b16 %v421
        %v1071 = vunpack.c.l.b16 %v422
        %v1072 = vunpack.c.h.b16 %v422
        %v1073 = vunpack.c.l.b16 %v423
        %v1074 = vunpack.c.h.b16 %v423
        %v1075 = vunpack.c.l.b16 %v424
        %v1076 = vunpack.c.h.b16 %v424
        %v1077 = vunpack.c.l.b16 %v425
        %v1078 = vunpack.c.h.b16 %v425
        %v1079 = vunpack.c.l.b16 %v426
        %v1080 = vunpack.c.h.b16 %v426
        %v1081 = vunpack.c.l.b16 %v427
        %v1082 = vunpack.c.h.b16 %v427
        %v1083 = vunpack.c.l.b16 %v428
        %v1084 = vunpack.c.h.b16 %v428
        %v1085 = vunpack.c.l.b16 %v429
        %v1086 = vunpack.c.h.b16 %v429
        %v1087 = vunpack.c.l.b16 %v430
        %v1088 = vunpack.c.h.b16 %v430
        %v1089 = vunpack.c.l.b16 %v431
        %v1090 = vunpack.c.h.b16 %v431
        %v1091 = vunpack.c.l.b16 %v432
        %v1092 = vunpack.c.h.b16 %v432
        %v1093 = vunpack.c.l.b16 %v433
        %v1094 = vunpack.c.h.b16 %v433
        %v1095 = vunpack.c.l.b16 %v434
        %v1096 = vunpack.c.h.b16 %v434
        %v1097 = vunpack.c.l.b16 %v435
        %v1098 = vunpack.c.h.b16 %v435
        %v1099 = vunpack.c.l.b16 %v436
        %v1100 = vunpack.c.h.b16 %v436
        %v1101 = vunpack.c.l.b16 %v437
        %v1102 = vunpack.c.h.b16 %v437
        %v1103 = vunpack.c.l.b16 %v438
        %v1104 = vunpack.c.h.b16 %v438
        %v1105 = vunpack.c.l.b16 %v439
        %v1106 = vunpack.c.h.b16 %v439
        %v1107 = vunpack.c.l.b16 %v440
        %v1108 = vunpack.c.h.b16 %v440
        %v1109 = vunpack.c.l.b16 %v441
        %v1110 = vunpack.c.h.b16 %v441
        %v1111 = vunpack.c.l.b16 %v442
        %v1112 = vunpack.c.h.b16 %v442
        %v1113 = vunpack.c.l.b16 %v443
        %v1114 = vunpack.c.h.b16 %v443
        %v1115 = vunpack.c.l.b16 %v444
        %v1116 = vunpack.c.h.b16 %v444
        %v1117 = vunpack.c.l.b16 %v445
        %v1118 = vunpack.c.h.b16 %v445
        %v1119 = vunpack.c.l.b16 %v446
        %v1120 = vunpack.c.h.b16 %v446
        %v1121 = vunpack.c.l.b16 %v447
        %v1122 = vunpack.c.h.b16 %v447
        %v1123 = vunpack.c.l.b16 %v448
        %v1124 = vunpack.c.h.b16 %v448
        %v1125 = vunpack.c.l.b16 %v449
        %v1126 = vunpack.c.h.b16 %v449
        %v1127 = vunpack.c.l.b16 %v450
        %v1128 = vunpack.c.h.b16 %v450
        %v1129 = vunpack.c.l.b16 %v451
        %v1130 = vunpack.c.h.b16 %v451
        %v1131 = vunpack.c.l.b16 %v452
        %v1132 = vunpack.c.h.b16 %v452
        %v1133 = vunpack.c.l.b16 %v453
        %v1134 = vunpack.c.h.b16 %v453
        %v1135 = vunpack.c.l.b16 %v454
        %v1136 = vunpack.c.h.b16 %v454
        %v1137 = vunpack.c.l.b16 %v455
        %v1138 = vunpack.c.h.b16 %v455
        %v1139 = vunpack.c.l.b16 %v456
        %v1140 = vunpack.c.h.b16 %v456
        %v1141 = vunpack.c.l.b16 %v457
        %v1142 = vunpack.c.h.b16 %v457
        %v1143 = vunpack.c.l.b16 %v458
        %v1144 = vunpack.c.h.b16 %v458
        %v1145 = vunpack.c.l.b16 %v459
        %v1146 = vunpack.c.h.b16 %v459
        %v1147 = vunpack.c.l.b16 %v460
        %v1148 = vunpack.c.h.b16 %v460
        %v1149 = vunpack.c.l.b16 %v461
        %v1150 = vunpack.c.h.b16 %v461
        %v1151 = vunpack.c.l.b16 %v462
        %v1152 = vunpack.c.h.b16 %v462
        %v1153 = vunpack.c.l.b16 %v463
        %v1154 = vunpack.c.h.b16 %v463
        %v1155 = vunpack.c.l.b16 %v464
        %v1156 = vunpack.c.h.b16 %v464
        %v1157 = vunpack.c.l.b16 %v465
        %v1158 = vunpack.c.h.b16 %v465
        %v1159 = vunpack.c.l.b16 %v466
        %v1160 = vunpack.c.h.b16 %v466
        %v1161 = vunpack.c.l.b16 %v467
        %v1162 = vunpack.c.h.b16 %v467
        %v1163 = vunpack.c.l.b16 %v468
        %v1164 = vunpack.c.h.b16 %v468
        %v1165 = vunpack.c.l.b16 %v469
        %v1166 = vunpack.c.h.b16 %v469
        %v1167 = vunpack.c.l.b16 %v470
        %v1168 = vunpack.c.h.b16 %v470
        %v1169 = vunpack.c.l.b16 %v471
        %v1170 = vunpack.c.h.b16 %v471
        %v1171 = vunpack.c.l.b16 %v472
        %v1172 = vunpack.c.h.b16 %v472
        %v1173 = vunpack.c.l.b16 %v473
        %v1174 = vunpack.c.h.b16 %v473
        %v1175 = vunpack.c.l.b16 %v474
        %v1176 = vunpack.c.h.b16 %v474
        %v1177 = vunpack.c.l.b16 %v475
        %v1178 = vunpack.c.h.b16 %v475
        %v1179 = vunpack.c.l.b16 %v476
        %v1180 = vunpack.c.h.b16 %v476
        %v1181 = vunpack.c.l.b16 %v477
        %v1182 = vunpack.c.h.b16 %v477
        %v1183 = vunpack.c.l.b16 %v478
        %v1184 = vunpack.c.h.b16 %v478
        %v1185 = vunpack.c.l.b16 %v479
        %v1186 = vunpack.c.h.b16 %v479
        %v1187 = vunpack.c.l.b16 %v480
        %v1188 = vunpack.c.h.b16 %v480
        %v1189 = vunpack.c.l.b16 %v481
        %v1190 = vunpack.c.h.b16 %v481
        %v1191 = vunpack.c.l.b16 %v482
        %v1192 = vunpack.c.h.b16 %v482
        %v1193 = vunpack.c.l.b16 %v483
        %v1194 = vunpack.c.h.b16 %v483
        %v1195 = vunpack.c.l.b16 %v484
        %v1196 = vunpack.c.h.b16 %v484
        %v1197 = vunpack.c.l.b16 %v485
        %v1198 = vunpack.c.h.b16 %v485
        %v1199 = vunpack.c.l.b16 %v486
        %v1200 = vunpack.c.h.b16 %v486
        %v1201 = vunpack.c.l.b16 %v487
        %v1202 = vunpack.c.h.b16 %v487
        %v1203 = vunpack.c.l.b16 %v488
        %v1204 = vunpack.c.h.b16 %v488
        %v1205 = vunpack.c.l.b16 %v489
        %v1206 = vunpack.c.h.b16 %v489
        %v1207 = vunpack.c.l.b16 %v490
        %v1208 = vunpack.c.h.b16 %v490
        %v1209 = vpack.c.b16 %v829, %v825
        %v1210 = vpack.c.b16 %v830, %v826
        %v1211 = vpack.c.b16 %v831, %v827
        %v1212 = vpack.c.b16 %v832, %v828
        %v1213 = vpack.c.b16 %v837, %v833
        %v1214 = vpack.c.b16 %v838, %v834
        %v1215 = vpack.c.b16 %v839, %v835
        %v1216 = vpack.c.b16 %v840, %v836
        %v1217 = vpack.c.b16 %v845, %v841
        %v1218 = vpack.c.b16 %v846, %v842
        %v1219 = vpack.c.b16 %v847, %v843
        %v1220 = vpack.c.b16 %v848, %v844
        %v1221 = vpack.c.b16 %v853, %v849
        %v1222 = vpack.c.b16 %v854, %v850
        %v1223 = vpack.c.b16 %v855, %v851
        %v1224 = vpack.c.b16 %v856, %v852
        %v1225 = vpack.c.b16 %v861, %v857
        %v1226 = vpack.c.b16 %v862, %v858
        %v1227 = vpack.c.b16 %v863, %v859
        %v1228 = vpack.c.b16 %v864, %v860
        %v1229 = vpack.c.b16 %v869, %v865
        %v1230 = vpack.c.b16 %v870, %v866
        %v1231 = vpack.c.b16 %v871, %v867
        %v1232 = vpack.c.b16 %v872, %v868
        %v1233 = vpack.c.b16 %v877, %v873
        %v1234 = vpack.c.b16 %v878, %v874
        %v1235 = vpack.c.b16 %v879, %v875
        %v1236 = vpack.c.b16 %v880, %v876
        %v1237 = vpack.c.b16 %v885, %v881
        %v1238 = vpack.c.b16 %v886, %v882
        %v1239 = vpack.c.b16 %v887, %v883
        %v1240 = vpack.c.b16 %v888, %v884
        %v1241 = vpack.c.b16 %v893, %v889
        %v1242 = vpack.c.b16 %v894, %v890
        %v1243 = vpack.c.b16 %v895, %v891
        %v1244 = vpack.c.b16 %v896, %v892
        %v1245 = vpack.c.b16 %v901, %v897
        %v1246 = vpack.c.b16 %v902, %v898
        %v1247 = vpack.c.b16 %v903, %v899
        %v1248 = vpack.c.b16 %v904, %v900
        %v1249 = vpack.c.b16 %v909, %v905
        %v1250 = vpack.c.b16 %v910, %v906
        %v1251 = vpack.c.b16 %v911, %v907
        %v1252 = vpack.c.b16 %v912, %v908
        %v1253 = vpack.c.b16 %v917, %v913
        %v1254 = vpack.c.b16 %v918, %v914
        %v1255 = vpack.c.b16 %v919, %v915
        %v1256 = vpack.c.b16 %v920, %v916
        %v1257 = vpack.c.b16 %v925, %v921
        %v1258 = vpack.c.b16 %v926, %v922
        %v1259 = vpack.c.b16 %v927, %v923
        %v1260 = vpack.c.b16 %v928, %v924
        %v1261 = vpack.c.b16 %v933, %v929
        %v1262 = vpack.c.b16 %v934, %v930
        %v1263 = vpack.c.b16 %v935, %v931
        %v1264 = vpack.c.b16 %v936, %v932
        %v1265 = vpack.c.b16 %v941, %v937
        %v1266 = vpack.c.b16 %v942, %v938
        %v1267 = vpack.c.b16 %v943, %v939
        %v1268 = vpack.c.b16 %v944, %v940
        %v1269 = vpack.c.b16 %v949, %v945
        %v1270 = vpack.c.b16 %v950, %v946
        %v1271 = vpack.c.b16 %v951, %v947
        %v1272 = vpack.c.b16 %v952, %v948
        %v1273 = vpack.c.b16 %v957, %v953
        %v1274 = vpack.c.b16 %v958, %v954
        %v1275 = vpack.c.b16 %v959, %v955
        %v1276 = vpack.c.b16 %v960, %v956
        %v1277 = vpack.c.b16 %v965, %v961
        %v1278 = vpack.c.b16 %v966, %v962
        %v1279 = vpack.c.b16 %v967, %v963
        %v1280 = vpack.c.b16 %v968, %v964
        %v1281 = vpack.c.b16 %v973, %v969
        %v1282 = vpack.c.b16 %v974, %v970
        %v1283 = vpack.c.b16 %v975, %v971
        %v1284 = vpack.c.b16 %v976, %v972
        %v1285 = vpack.c.b16 %v981, %v977
        %v1286 = vpack.c.b16 %v982, %v978
        %v1287 = vpack.c.b16 %v983, %v979
        %v1288 = vpack.c.b16 %v984, %v980
        %v1289 = vpack.c.b16 %v989, %v985
        %v1290 = vpack.c.b16 %v990, %v986
        %v1291 = vpack.c.b16 %v991, %v987
        %v1292 = vpack.c.b16 %v992, %v988
        %v1293 = vpack.c.b16 %v997, %v993
        %v1294 = vpack.c.b16 %v998, %v994
        %v1295 = vpack.c.b16 %v999, %v995
        %v1296 = vpack.c.b16 %v1000, %v996
        %v1297 = vpack.c.b16 %v1005, %v1001
        %v1298 = vpack.c.b16 %v1006, %v1002
        %v1299 = vpack.c.b16 %v1007, %v1003
        %v1300 = vpack.c.b16 %v1008, %v1004
        %v1301 = vpack.c.b16 %v1013, %v1009
        %v1302 = vpack.c.b16 %v1014, %v1010
        %v1303 = vpack.c.b16 %v1015, %v1011
        %v1304 = vpack.c.b16 %v1016, %v1012
        %v1305 = vpack.c.b16 %v1021, %v1017
        %v1306 = vpack.c.b16 %v1022, %v1018
        %v1307 = vpack.c.b16 %v1023, %v1019
        %v1308 = vpack.c.b16 %v1024, %v1020
        %v1309 = vpack.c.b16 %v1029, %v1025
        %v1310 = vpack.c.b16 %v1030, %v1026
        %v1311 = vpack.c.b16 %v1031, %v1027
        %v1312 = vpack.c.b16 %v1032, %v1028
        %v1313 = vpack.c.b16 %v1037, %v1033
        %v1314 = vpack.c.b16 %v1038, %v1034
        %v1315 = vpack.c.b16 %v1039, %v1035
        %v1316 = vpack.c.b16 %v1040, %v1036
        %v1317 = vpack.c.b16 %v1045, %v1041
        %v1318 = vpack.c.b16 %v1046, %v1042
        %v1319 = vpack.c.b16 %v1047, %v1043
        %v1320 = vpack.c.b16 %v1048, %v1044
        %v1321 = vpack.c.b16 %v1053, %v1049
        %v1322 = vpack.c.b16 %v1054, %v1050
        %v1323 = vpack.c.b16 %v1055, %v1051
        %v1324 = vpack.c.b16 %v1056, %v1052
        %v1325 = vpack.c.b16 %v1061, %v1057
        %v1326 = vpack.c.b16 %v1062, %v1058
        %v1327 = vpack.c.b16 %v1063, %v1059
        %v1328 = vpack.c.b16 %v1064, %v1060
        %v1329 = vpack.c.b16 %v1069, %v1065
        %v1330 = vpack.c.b16 %v1070, %v1066
        %v1331 = vpack.c.b16 %v1071, %v1067
        %v1332 = vpack.c.b16 %v1072, %v1068
        %v1333 = vpack.c.b16 %v1077, %v1073
        %v1334 = vpack.c.b16 %v1078, %v1074
        %v1335 = vpack.c.b16 %v1079, %v1075
        %v1336 = vpack.c.b16 %v1080, %v1076
        %v1337 = vpack.c.b16 %v1085, %v1081
        %v1338 = vpack.c.b16 %v1086, %v1082
        %v1339 = vpack.c.b16 %v1087, %v1083
        %v1340 = vpack.c.b16 %v1088, %v1084
        %v1341 = vpack.c.b16 %v1093, %v1089
        %v1342 = vpack.c.b16 %v1094, %v1090
        %v1343 = vpack.c.b16 %v1095, %v1091
        %v1344 = vpack.c.b16 %v1096, %v1092
        %v1345 = vpack.c.b16 %v1101, %v1097
        %v1346 = vpack.c.b16 %v1102, %v1098
        %v1347 = vpack.c.b16 %v1103, %v1099
        %v1348 = vpack.c.b16 %v1104, %v1100
        %v1349 = vpack.c.b16 %v1109, %v1105
        %v1350 = vpack.c.b16 %v1110, %v1106
        %v1351 = vpack.c.b16 %v1111, %v1107
        %v1352 = vpack.c.b16 %v1112, %v1108
        %v1353 = vpack.c.b16 %v1117, %v1113
        %v1354 = vpack.c.b16 %v1118, %v1114
        %v1355 = vpack.c.b16 %v1119, %v1115
        %v1356 = vpack.c.b16 %v1120, %v1116
        %v1357 = vpack.c.b16 %v1125, %v1121
        %v1358 = vpack.c.b16 %v1126, %v1122
        %v1359 = vpack.c.b16 %v1127, %v1123
        %v1360 = vpack.c.b16 %v1128, %v1124
        %v1361 = vpack.c.b16 %v1133, %v1129
        %v1362 = vpack.c.b16 %v1134, %v1130
        %v1363 = vpack.c.b16 %v1135, %v1131
        %v1364 = vpack.c.b16 %v1136, %v1132
        %v1365 = vpack.c.b16 %v1141, %v1137
        %v1366 = vpack.c.b16 %v1142, %v1138
        %v1367 = vpack.c.b16 %v1143, %v1139
        %v1368 = vpack.c.b16 %v1144, %v1140
        %v1369 = vpack.c.b16 %v1149, %v1145
        %v1370 = vpack.c.b16 %v1150, %v1146
        %v1371 = vpack.c.b16 %v1151, %v1147
        %v1372 = vpack.c.b16 %v1152, %v1148
        %v1373 = vpack.c.b16 %v1157, %v1153
        %v1374 = vpack.c.b16 %v1158, %v1154
        %v1375 = vpack.c.b16 %v1159, %v1155
        %v1376 = vpack.c.b16 %v1160, %v1156
        %v1377 = vpack.c.b16 %v1165, %v1161
        %v1378 = vpack.c.b16 %v1166, %v1162
        %v1379 = vpack.c.b16 %v1167, %v1163
        %v1380 = vpack.c.b16 %v1168, %v1164
        %v1381 = vpack.c.b16 %v1173, %v1169
        %v1382 = vpack.c.b16 %v1174, %v1170
        %v1383 = vpack.c.b16 %v1175, %v1171
        %v1384 = vpack.c.b16 %v1176, %v1172
        %v1385 = vpack.c.b16 %v1181, %v1177
        %v1386 = vpack.c.b16 %v1182, %v1178
        %v1387 = vpack.c.b16 %v1183, %v1179
        %v1388 = vpack.c.b16 %v1184, %v1180
        %v1389 = vpack.c.b16 %v1189, %v1185
        %v1390 = vpack.c.b16 %v1190, %v1186
        %v1391 = vpack.c.b16 %v1191, %v1187
        %v1392 = vpack.c.b16 %v1192, %v1188
        %v1393 = vpack.c.b16 %v1197, %v1193
        %v1394 = vpack.c.b16 %v1198, %v1194
        %v1395 = vpack.c.b16 %v1199, %v1195
        %v1396 = vpack.c.b16 %v1200, %v1196
        %v1397 = vpack.c.b16 %v1205, %v1201
        %v1398 = vpack.c.b16 %v1206, %v1202
        %v1399 = vpack.c.b16 %v1207, %v1203
        %v1400 = vpack.c.b16 %v1208, %v1204
        %1593 = vmatprep.subr.bf16.mxu0 %v1210
        %1594 = vmatpush1.bf16.msra.mxu0 %v1209
        %1595 = vmatprep.subr.bf16.mxu0 %v1214
        %1596 = vmatpush1.bf16.msra.mxu0 %v1213
        %1597 = vmatprep.subr.bf16.mxu0 %v1218
        %1598 = vmatpush1.bf16.msra.mxu0 %v1217
        %1599 = vmatprep.subr.bf16.mxu0 %v1222
        %1600 = vmatpush1.bf16.msra.mxu0 %v1221
        %1601 = vmatprep.subr.bf16.mxu0 %v1226
        %1602 = vmatpush1.bf16.msra.mxu0 %v1225
        %1603 = vmatprep.subr.bf16.mxu0 %v1230
        %1604 = vmatpush1.bf16.msra.mxu0 %v1229
        %1605 = vmatprep.subr.bf16.mxu0 %v1234
        %1606 = vmatpush1.bf16.msra.mxu0 %v1233
        %1607 = vmatprep.subr.bf16.mxu0 %v1238
        %1608 = vmatpush1.bf16.msra.mxu0 %v1237
        %1609 = vmatprep.subr.bf16.mxu0 %v1242
        %1610 = vmatpush1.bf16.msra.mxu0 %v1241
        %1611 = vmatprep.subr.bf16.mxu0 %v1246
        %1612 = vmatpush1.bf16.msra.mxu0 %v1245
        %1613 = vmatprep.subr.bf16.mxu0 %v1250
        %1614 = vmatpush1.bf16.msra.mxu0 %v1249
        %1615 = vmatprep.subr.bf16.mxu0 %v1254
        %1616 = vmatpush1.bf16.msra.mxu0 %v1253
        %1617 = vmatprep.subr.bf16.mxu0 %v1258
        %1618 = vmatpush1.bf16.msra.mxu0 %v1257
        %1619 = vmatprep.subr.bf16.mxu0 %v1262
        %1620 = vmatpush1.bf16.msra.mxu0 %v1261
        %1621 = vmatprep.subr.bf16.mxu0 %v1266
        %1622 = vmatpush1.bf16.msra.mxu0 %v1265
        %1623 = vmatprep.subr.bf16.mxu0 %v1270
        %1624 = vmatpush1.bf16.msra.mxu0 %v1269
        %1625 = vmatprep.mubr.bf16.mxu0 %v586
        %1626 = vmatmul.mubr.bf16.gmra.mrb[0].mxu0 %v585
        %v1627 = vpop.f32.mrb[0].mxu0
        %v1628 = vadd.f32 %v496, %v1627
        %v1629 = vpop.f32.mrb[0].mxu0
        %v1630 = vadd.f32 %v500, %v1629
        %v1631 = vpop.f32.mrb[0].mxu0
        %v1632 = vadd.f32 %v496, %v1631
        %v1633 = vpop.f32.mrb[0].mxu0
        %v1634 = vadd.f32 %v500, %v1633
        %1635 = vmatprep.mubr.bf16.mxu0 %v592
        %1636 = vmatmul.mubr.bf16.gmra.mrb[0].mxu0 %v591
        %v1637 = vpop.f32.mrb[0].mxu0
        %v1638 = vadd.f32 %v496, %v1637
        %v1639 = vpop.f32.mrb[0].mxu0
        %v1640 = vadd.f32 %v500, %v1639
        %v1641 = vpop.f32.mrb[0].mxu0
        %v1642 = vadd.f32 %v496, %v1641
        %v1643 = vpop.f32.mrb[0].mxu0
        %v1644 = vadd.f32 %v500, %v1643
        %1645 = vmatprep.mubr.bf16.mxu0 %v598
        %1646 = vmatmul.mubr.bf16.gmra.mrb[0].mxu0 %v597
        %v1647 = vpop.f32.mrb[0].mxu0
        %v1648 = vadd.f32 %v496, %v1647
        %v1649 = vpop.f32.mrb[0].mxu0
        %v1650 = vadd.f32 %v500, %v1649
        %v1651 = vpop.f32.mrb[0].mxu0
        %v1652 = vadd.f32 %v496, %v1651
        %v1653 = vpop.f32.mrb[0].mxu0
        %v1654 = vadd.f32 %v500, %v1653
        %1655 = vmatprep.mubr.bf16.mxu0 %v604
        %1656 = vmatmul.mubr.bf16.gmra.mrb[0].mxu0 %v603
        %v1657 = vpop.f32.mrb[0].mxu0
        %v1658 = vadd.f32 %v496, %v1657
        %v1659 = vpop.f32.mrb[0].mxu0
        %v1660 = vadd.f32 %v500, %v1659
        %v1661 = vpop.f32.mrb[0].mxu0
        %v1662 = vadd.f32 %v496, %v1661
        %v1663 = vpop.f32.mrb[0].mxu0
        %v1664 = vadd.f32 %v500, %v1663
        %1665 = vdwg.mxu0
        %1666 = vmatprep.subr.bf16.mxu0 %v1274
        %1667 = vmatpush1.bf16.msra.mxu0 %v1273
        %1668 = vmatprep.subr.bf16.mxu0 %v1278
        %1669 = vmatpush1.bf16.msra.mxu0 %v1277
        %1670 = vmatprep.subr.bf16.mxu0 %v1282
        %1671 = vmatpush1.bf16.msra.mxu0 %v1281
        %1672 = vmatprep.subr.bf16.mxu0 %v1286
        %1673 = vmatpush1.bf16.msra.mxu0 %v1285
        %1674 = vmatprep.subr.bf16.mxu0 %v1290
        %1675 = vmatpush1.bf16.msra.mxu0 %v1289
        %1676 = vmatprep.subr.bf16.mxu0 %v1294
        %1677 = vmatpush1.bf16.msra.mxu0 %v1293
        %1678 = vmatprep.subr.bf16.mxu0 %v1298
        %1679 = vmatpush1.bf16.msra.mxu0 %v1297
        %1680 = vmatprep.subr.bf16.mxu0 %v1302
        %1681 = vmatpush1.bf16.msra.mxu0 %v1301
        %1682 = vmatprep.subr.bf16.mxu0 %v1306
        %1683 = vmatpush1.bf16.msra.mxu0 %v1305
        %1684 = vmatprep.subr.bf16.mxu0 %v1310
        %1685 = vmatpush1.bf16.msra.mxu0 %v1309
        %1686 = vmatprep.subr.bf16.mxu0 %v1314
        %1687 = vmatpush1.bf16.msra.mxu0 %v1313
        %1688 = vmatprep.subr.bf16.mxu0 %v1318
        %1689 = vmatpush1.bf16.msra.mxu0 %v1317
        %1690 = vmatprep.subr.bf16.mxu0 %v1322
        %1691 = vmatpush1.bf16.msra.mxu0 %v1321
        %1692 = vmatprep.subr.bf16.mxu0 %v1326
        %1693 = vmatpush1.bf16.msra.mxu0 %v1325
        %1694 = vmatprep.subr.bf16.mxu0 %v1330
        %1695 = vmatpush1.bf16.msra.mxu0 %v1329
        %1696 = vmatprep.subr.bf16.mxu0 %v1334
        %1697 = vmatpush1.bf16.msra.mxu0 %v1333
        %1698 = vmatprep.mubr.bf16.mxu0 %v588
        %1699 = vmatmul.mubr.bf16.gmra.mrb[0].mxu0 %v587
        %v1700 = vpop.f32.mrb[0].mxu0
        %v1701 = vadd.f32 %v1628, %v1700
        %v1702 = vpop.f32.mrb[0].mxu0
        %v1703 = vadd.f32 %v1630, %v1702
        %v1704 = vpop.f32.mrb[0].mxu0
        %v1705 = vadd.f32 %v1632, %v1704
        %v1706 = vpop.f32.mrb[0].mxu0
        %v1707 = vadd.f32 %v1634, %v1706
        %1708 = vmatprep.mubr.bf16.mxu0 %v594
        %1709 = vmatmul.mubr.bf16.gmra.mrb[0].mxu0 %v593
        %v1710 = vpop.f32.mrb[0].mxu0
        %v1711 = vadd.f32 %v1638, %v1710
        %v1712 = vpop.f32.mrb[0].mxu0
        %v1713 = vadd.f32 %v1640, %v1712
        %v1714 = vpop.f32.mrb[0].mxu0
        %v1715 = vadd.f32 %v1642, %v1714
        %v1716 = vpop.f32.mrb[0].mxu0
        %v1717 = vadd.f32 %v1644, %v1716
        %1718 = vmatprep.mubr.bf16.mxu0 %v600
        %1719 = vmatmul.mubr.bf16.gmra.mrb[0].mxu0 %v599
        %v1720 = vpop.f32.mrb[0].mxu0
        %v1721 = vadd.f32 %v1648, %v1720
        %v1722 = vpop.f32.mrb[0].mxu0
        %v1723 = vadd.f32 %v1650, %v1722
        %v1724 = vpop.f32.mrb[0].mxu0
        %v1725 = vadd.f32 %v1652, %v1724
        %v1726 = vpop.f32.mrb[0].mxu0
        %v1727 = vadd.f32 %v1654, %v1726
        %1728 = vmatprep.mubr.bf16.mxu0 %v606
        %1729 = vmatmul.mubr.bf16.gmra.mrb[0].mxu0 %v605
        %v1730 = vpop.f32.mrb[0].mxu0
        %v1731 = vadd.f32 %v1658, %v1730
        %v1732 = vpop.f32.mrb[0].mxu0
        %v1733 = vadd.f32 %v1660, %v1732
        %v1734 = vpop.f32.mrb[0].mxu0
        %v1735 = vadd.f32 %v1662, %v1734
        %v1736 = vpop.f32.mrb[0].mxu0
        %v1737 = vadd.f32 %v1664, %v1736
        %1738 = vdwg.mxu0
        %1739 = vmatprep.subr.bf16.mxu0 %v1338
        %1740 = vmatpush1.bf16.msra.mxu0 %v1337
        %1741 = vmatprep.subr.bf16.mxu0 %v1342
        %1742 = vmatpush1.bf16.msra.mxu0 %v1341
        %1743 = vmatprep.subr.bf16.mxu0 %v1346
        %1744 = vmatpush1.bf16.msra.mxu0 %v1345
        %1745 = vmatprep.subr.bf16.mxu0 %v1350
        %1746 = vmatpush1.bf16.msra.mxu0 %v1349
        %1747 = vmatprep.subr.bf16.mxu0 %v1354
        %1748 = vmatpush1.bf16.msra.mxu0 %v1353
        %1749 = vmatprep.subr.bf16.mxu0 %v1358
        %1750 = vmatpush1.bf16.msra.mxu0 %v1357
        %1751 = vmatprep.subr.bf16.mxu0 %v1362
        %1752 = vmatpush1.bf16.msra.mxu0 %v1361
        %1753 = vmatprep.subr.bf16.mxu0 %v1366
        %1754 = vmatpush1.bf16.msra.mxu0 %v1365
        %1755 = vmatprep.subr.bf16.mxu0 %v1370
        %1756 = vmatpush1.bf16.msra.mxu0 %v1369
        %1757 = vmatprep.subr.bf16.mxu0 %v1374
        %1758 = vmatpush1.bf16.msra.mxu0 %v1373
        %1759 = vmatprep.subr.bf16.mxu0 %v1378
        %1760 = vmatpush1.bf16.msra.mxu0 %v1377
        %1761 = vmatprep.subr.bf16.mxu0 %v1382
        %1762 = vmatpush1.bf16.msra.mxu0 %v1381
        %1763 = vmatprep.subr.bf16.mxu0 %v1386
        %1764 = vmatpush1.bf16.msra.mxu0 %v1385
        %1765 = vmatprep.subr.bf16.mxu0 %v1390
        %1766 = vmatpush1.bf16.msra.mxu0 %v1389
        %1767 = vmatprep.subr.bf16.mxu0 %v1394
        %1768 = vmatpush1.bf16.msra.mxu0 %v1393
        %1769 = vmatprep.subr.bf16.mxu0 %v1398
        %1770 = vmatpush1.bf16.msra.mxu0 %v1397
        %1771 = vmatprep.mubr.bf16.mxu0 %v590
        %1772 = vmatmul.mubr.bf16.gmra.mrb[0].mxu0 %v589
        %v1773 = vpop.f32.mrb[0].mxu0
        %v1774 = vadd.f32 %v1701, %v1773
        %v1775 = vpop.f32.mrb[0].mxu0
        %v1776 = vadd.f32 %v1703, %v1775
        %v1777 = vpop.f32.mrb[0].mxu0
        %v1778 = vadd.f32 %v1705, %v1777
        %v1779 = vpop.f32.mrb[0].mxu0
        %v1780 = vadd.f32 %v1707, %v1779
        %1781 = vmatprep.mubr.bf16.mxu0 %v596
        %1782 = vmatmul.mubr.bf16.gmra.mrb[0].mxu0 %v595
        %v1783 = vpop.f32.mrb[0].mxu0
        %v1784 = vadd.f32 %v1711, %v1783
        %v1785 = vpop.f32.mrb[0].mxu0
        %v1786 = vadd.f32 %v1713, %v1785
        %v1787 = vpop.f32.mrb[0].mxu0
        %v1788 = vadd.f32 %v1715, %v1787
        %v1789 = vpop.f32.mrb[0].mxu0
        %v1790 = vadd.f32 %v1717, %v1789
        %1791 = vmatprep.mubr.bf16.mxu0 %v602
        %1792 = vmatmul.mubr.bf16.gmra.mrb[0].mxu0 %v601
        %v1793 = vpop.f32.mrb[0].mxu0
        %v1794 = vadd.f32 %v1721, %v1793
        %v1795 = vpop.f32.mrb[0].mxu0
        %v1796 = vadd.f32 %v1723, %v1795
        %v1797 = vpop.f32.mrb[0].mxu0
        %v1798 = vadd.f32 %v1725, %v1797
        %v1799 = vpop.f32.mrb[0].mxu0
        %v1800 = vadd.f32 %v1727, %v1799
        %1801 = vmatprep.mubr.bf16.mxu0 %v608
        %1802 = vmatmul.mubr.bf16.gmra.mrb[0].mxu0 %v607
        %v1803 = vpop.f32.mrb[0].mxu0
        %v1804 = vadd.f32 %v1731, %v1803
        %v1805 = vpop.f32.mrb[0].mxu0
        %v1806 = vadd.f32 %v1733, %v1805
        %v1807 = vpop.f32.mrb[0].mxu0
        %v1808 = vadd.f32 %v1735, %v1807
        %v1809 = vpop.f32.mrb[0].mxu0
        %v1810 = vadd.f32 %v1737, %v1809
        %1811 = vdwg.mxu0
        %1812 = vmatprep.subr.bf16.mxu0 %v1212
        %1813 = vmatpush1.bf16.msra.mxu0 %v1211
        %1814 = vmatprep.subr.bf16.mxu0 %v1216
        %1815 = vmatpush1.bf16.msra.mxu0 %v1215
        %1816 = vmatprep.subr.bf16.mxu0 %v1220
        %1817 = vmatpush1.bf16.msra.mxu0 %v1219
        %1818 = vmatprep.subr.bf16.mxu0 %v1224
        %1819 = vmatpush1.bf16.msra.mxu0 %v1223
        %1820 = vmatprep.subr.bf16.mxu0 %v1228
        %1821 = vmatpush1.bf16.msra.mxu0 %v1227
        %1822 = vmatprep.subr.bf16.mxu0 %v1232
        %1823 = vmatpush1.bf16.msra.mxu0 %v1231
        %1824 = vmatprep.subr.bf16.mxu0 %v1236
        %1825 = vmatpush1.bf16.msra.mxu0 %v1235
        %1826 = vmatprep.subr.bf16.mxu0 %v1240
        %1827 = vmatpush1.bf16.msra.mxu0 %v1239
        %1828 = vmatprep.subr.bf16.mxu0 %v1244
        %1829 = vmatpush1.bf16.msra.mxu0 %v1243
        %1830 = vmatprep.subr.bf16.mxu0 %v1248
        %1831 = vmatpush1.bf16.msra.mxu0 %v1247
        %1832 = vmatprep.subr.bf16.mxu0 %v1252
        %1833 = vmatpush1.bf16.msra.mxu0 %v1251
        %1834 = vmatprep.subr.bf16.mxu0 %v1256
        %1835 = vmatpush1.bf16.msra.mxu0 %v1255
        %1836 = vmatprep.subr.bf16.mxu0 %v1260
        %1837 = vmatpush1.bf16.msra.mxu0 %v1259
        %1838 = vmatprep.subr.bf16.mxu0 %v1264
        %1839 = vmatpush1.bf16.msra.mxu0 %v1263
        %1840 = vmatprep.subr.bf16.mxu0 %v1268
        %1841 = vmatpush1.bf16.msra.mxu0 %v1267
        %1842 = vmatprep.subr.bf16.mxu0 %v1272
        %1843 = vmatpush1.bf16.msra.mxu0 %v1271
        %1844 = vmatprep.mubr.bf16.mxu0 %v586
        %1845 = vmatmul.mubr.bf16.gmra.mrb[0].mxu0 %v585
        %v1846 = vpop.f32.mrb[0].mxu0
        %v1847 = vadd.f32 %v504, %v1846
        %v1848 = vpop.f32.mrb[0].mxu0
        %v1849 = vadd.f32 %v508, %v1848
        %v1850 = vpop.f32.mrb[0].mxu0
        %v1851 = vadd.f32 %v504, %v1850
        %v1852 = vpop.f32.mrb[0].mxu0
        %v1853 = vadd.f32 %v508, %v1852
        %1854 = vmatprep.mubr.bf16.mxu0 %v592
        %1855 = vmatmul.mubr.bf16.gmra.mrb[0].mxu0 %v591
        %v1856 = vpop.f32.mrb[0].mxu0
        %v1857 = vadd.f32 %v504, %v1856
        %v1858 = vpop.f32.mrb[0].mxu0
        %v1859 = vadd.f32 %v508, %v1858
        %v1860 = vpop.f32.mrb[0].mxu0
        %v1861 = vadd.f32 %v504, %v1860
        %v1862 = vpop.f32.mrb[0].mxu0
        %v1863 = vadd.f32 %v508, %v1862
        %1864 = vmatprep.mubr.bf16.mxu0 %v598
        %1865 = vmatmul.mubr.bf16.gmra.mrb[0].mxu0 %v597
        %v1866 = vpop.f32.mrb[0].mxu0
        %v1867 = vadd.f32 %v504, %v1866
        %v1868 = vpop.f32.mrb[0].mxu0
        %v1869 = vadd.f32 %v508, %v1868
        %v1870 = vpop.f32.mrb[0].mxu0
        %v1871 = vadd.f32 %v504, %v1870
        %v1872 = vpop.f32.mrb[0].mxu0
        %v1873 = vadd.f32 %v508, %v1872
        %1874 = vmatprep.mubr.bf16.mxu0 %v604
        %1875 = vmatmul.mubr.bf16.gmra.mrb[0].mxu0 %v603
        %v1876 = vpop.f32.mrb[0].mxu0
        %v1877 = vadd.f32 %v504, %v1876
        %v1878 = vpop.f32.mrb[0].mxu0
        %v1879 = vadd.f32 %v508, %v1878
        %v1880 = vpop.f32.mrb[0].mxu0
        %v1881 = vadd.f32 %v504, %v1880
        %v1882 = vpop.f32.mrb[0].mxu0
        %v1883 = vadd.f32 %v508, %v1882
        %1884 = vdwg.mxu0
        %1885 = vmatprep.subr.bf16.mxu0 %v1276
        %1886 = vmatpush1.bf16.msra.mxu0 %v1275
        %1887 = vmatprep.subr.bf16.mxu0 %v1280
        %1888 = vmatpush1.bf16.msra.mxu0 %v1279
        %1889 = vmatprep.subr.bf16.mxu0 %v1284
        %1890 = vmatpush1.bf16.msra.mxu0 %v1283
        %1891 = vmatprep.subr.bf16.mxu0 %v1288
        %1892 = vmatpush1.bf16.msra.mxu0 %v1287
        %1893 = vmatprep.subr.bf16.mxu0 %v1292
        %1894 = vmatpush1.bf16.msra.mxu0 %v1291
        %1895 = vmatprep.subr.bf16.mxu0 %v1296
        %1896 = vmatpush1.bf16.msra.mxu0 %v1295
        %1897 = vmatprep.subr.bf16.mxu0 %v1300
        %1898 = vmatpush1.bf16.msra.mxu0 %v1299
        %1899 = vmatprep.subr.bf16.mxu0 %v1304
        %1900 = vmatpush1.bf16.msra.mxu0 %v1303
        %1901 = vmatprep.subr.bf16.mxu0 %v1308
        %1902 = vmatpush1.bf16.msra.mxu0 %v1307
        %1903 = vmatprep.subr.bf16.mxu0 %v1312
        %1904 = vmatpush1.bf16.msra.mxu0 %v1311
        %1905 = vmatprep.subr.bf16.mxu0 %v1316
        %1906 = vmatpush1.bf16.msra.mxu0 %v1315
        %1907 = vmatprep.subr.bf16.mxu0 %v1320
        %1908 = vmatpush1.bf16.msra.mxu0 %v1319
        %1909 = vmatprep.subr.bf16.mxu0 %v1324
        %1910 = vmatpush1.bf16.msra.mxu0 %v1323
        %1911 = vmatprep.subr.bf16.mxu0 %v1328
        %1912 = vmatpush1.bf16.msra.mxu0 %v1327
        %1913 = vmatprep.subr.bf16.mxu0 %v1332
        %1914 = vmatpush1.bf16.msra.mxu0 %v1331
        %1915 = vmatprep.subr.bf16.mxu0 %v1336
        %1916 = vmatpush1.bf16.msra.mxu0 %v1335
        %1917 = vmatprep.mubr.bf16.mxu0 %v588
        %1918 = vmatmul.mubr.bf16.gmra.mrb[0].mxu0 %v587
        %v1919 = vpop.f32.mrb[0].mxu0
        %v1920 = vadd.f32 %v1847, %v1919
        %v1921 = vpop.f32.mrb[0].mxu0
        %v1922 = vadd.f32 %v1849, %v1921
        %v1923 = vpop.f32.mrb[0].mxu0
        %v1924 = vadd.f32 %v1851, %v1923
        %v1925 = vpop.f32.mrb[0].mxu0
        %v1926 = vadd.f32 %v1853, %v1925
        %1927 = vmatprep.mubr.bf16.mxu0 %v594
        %1928 = vmatmul.mubr.bf16.gmra.mrb[0].mxu0 %v593
        %v1929 = vpop.f32.mrb[0].mxu0
        %v1930 = vadd.f32 %v1857, %v1929
        %v1931 = vpop.f32.mrb[0].mxu0
        %v1932 = vadd.f32 %v1859, %v1931
        %v1933 = vpop.f32.mrb[0].mxu0
        %v1934 = vadd.f32 %v1861, %v1933
        %v1935 = vpop.f32.mrb[0].mxu0
        %v1936 = vadd.f32 %v1863, %v1935
        %1937 = vmatprep.mubr.bf16.mxu0 %v600
        %1938 = vmatmul.mubr.bf16.gmra.mrb[0].mxu0 %v599
        %v1939 = vpop.f32.mrb[0].mxu0
        %v1940 = vadd.f32 %v1867, %v1939
        %v1941 = vpop.f32.mrb[0].mxu0
        %v1942 = vadd.f32 %v1869, %v1941
        %v1943 = vpop.f32.mrb[0].mxu0
        %v1944 = vadd.f32 %v1871, %v1943
        %v1945 = vpop.f32.mrb[0].mxu0
        %v1946 = vadd.f32 %v1873, %v1945
        %1947 = vmatprep.mubr.bf16.mxu0 %v606
        %1948 = vmatmul.mubr.bf16.gmra.mrb[0].mxu0 %v605
        %v1949 = vpop.f32.mrb[0].mxu0
        %v1950 = vadd.f32 %v1877, %v1949
        %v1951 = vpop.f32.mrb[0].mxu0
        %v1952 = vadd.f32 %v1879, %v1951
        %v1953 = vpop.f32.mrb[0].mxu0
        %v1954 = vadd.f32 %v1881, %v1953
        %v1955 = vpop.f32.mrb[0].mxu0
        %v1956 = vadd.f32 %v1883, %v1955
        %1957 = vdwg.mxu0
        %1958 = vmatprep.subr.bf16.mxu0 %v1340
        %1959 = vmatpush1.bf16.msra.mxu0 %v1339
        %1960 = vmatprep.subr.bf16.mxu0 %v1344
        %1961 = vmatpush1.bf16.msra.mxu0 %v1343
        %1962 = vmatprep.subr.bf16.mxu0 %v1348
        %1963 = vmatpush1.bf16.msra.mxu0 %v1347
        %1964 = vmatprep.subr.bf16.mxu0 %v1352
        %1965 = vmatpush1.bf16.msra.mxu0 %v1351
        %1966 = vmatprep.subr.bf16.mxu0 %v1356
        %1967 = vmatpush1.bf16.msra.mxu0 %v1355
        %1968 = vmatprep.subr.bf16.mxu0 %v1360
        %1969 = vmatpush1.bf16.msra.mxu0 %v1359
        %1970 = vmatprep.subr.bf16.mxu0 %v1364
        %1971 = vmatpush1.bf16.msra.mxu0 %v1363
        %1972 = vmatprep.subr.bf16.mxu0 %v1368
        %1973 = vmatpush1.bf16.msra.mxu0 %v1367
        %1974 = vmatprep.subr.bf16.mxu0 %v1372
        %1975 = vmatpush1.bf16.msra.mxu0 %v1371
        %1976 = vmatprep.subr.bf16.mxu0 %v1376
        %1977 = vmatpush1.bf16.msra.mxu0 %v1375
        %1978 = vmatprep.subr.bf16.mxu0 %v1380
        %1979 = vmatpush1.bf16.msra.mxu0 %v1379
        %1980 = vmatprep.subr.bf16.mxu0 %v1384
        %1981 = vmatpush1.bf16.msra.mxu0 %v1383
        %1982 = vmatprep.subr.bf16.mxu0 %v1388
        %1983 = vmatpush1.bf16.msra.mxu0 %v1387
        %1984 = vmatprep.subr.bf16.mxu0 %v1392
        %1985 = vmatpush1.bf16.msra.mxu0 %v1391
        %1986 = vmatprep.subr.bf16.mxu0 %v1396
        %1987 = vmatpush1.bf16.msra.mxu0 %v1395
        %1988 = vmatprep.subr.bf16.mxu0 %v1400
        %1989 = vmatpush1.bf16.msra.mxu0 %v1399
        %1990 = vmatprep.mubr.bf16.mxu0 %v590
        %1991 = vmatmul.mubr.bf16.gmra.mrb[0].mxu0 %v589
        %v1992 = vpop.f32.mrb[0].mxu0
        %v1993 = vadd.f32 %v1920, %v1992
        %v1994 = vpop.f32.mrb[0].mxu0
        %v1995 = vadd.f32 %v1922, %v1994
        %v1996 = vpop.f32.mrb[0].mxu0
        %v1997 = vadd.f32 %v1924, %v1996
        %v1998 = vpop.f32.mrb[0].mxu0
        %v1999 = vadd.f32 %v1926, %v1998
        %2000 = vmatprep.mubr.bf16.mxu0 %v596
        %2001 = vmatmul.mubr.bf16.gmra.mrb[0].mxu0 %v595
        %v2002 = vpop.f32.mrb[0].mxu0
        %v2003 = vadd.f32 %v1930, %v2002
        %v2004 = vpop.f32.mrb[0].mxu0
        %v2005 = vadd.f32 %v1932, %v2004
        %v2006 = vpop.f32.mrb[0].mxu0
        %v2007 = vadd.f32 %v1934, %v2006
        %v2008 = vpop.f32.mrb[0].mxu0
        %v2009 = vadd.f32 %v1936, %v2008
        %2010 = vmatprep.mubr.bf16.mxu0 %v602
        %2011 = vmatmul.mubr.bf16.gmra.mrb[0].mxu0 %v601
        %v2012 = vpop.f32.mrb[0].mxu0
        %v2013 = vadd.f32 %v1940, %v2012
        %v2014 = vpop.f32.mrb[0].mxu0
        %v2015 = vadd.f32 %v1942, %v2014
        %v2016 = vpop.f32.mrb[0].mxu0
        %v2017 = vadd.f32 %v1944, %v2016
        %v2018 = vpop.f32.mrb[0].mxu0
        %v2019 = vadd.f32 %v1946, %v2018
        %2020 = vmatprep.mubr.bf16.mxu0 %v608
        %2021 = vmatmul.mubr.bf16.gmra.mrb[0].mxu0 %v607
        %v2022 = vpop.f32.mrb[0].mxu0
        %v2023 = vadd.f32 %v1950, %v2022
        %v2024 = vpop.f32.mrb[0].mxu0
        %v2025 = vadd.f32 %v1952, %v2024
        %v2026 = vpop.f32.mrb[0].mxu0
        %v2027 = vadd.f32 %v1954, %v2026
        %v2028 = vpop.f32.mrb[0].mxu0
        %v2029 = vadd.f32 %v1956, %v2028
        %2030 = vdwg.mxu0
        %v2031 = vmax.f32 %v1774, 0.0
        %v2032 = vmax.f32 %v1776, 0.0
        %v2033 = vmax.f32 %v1993, 0.0
        %v2034 = vmax.f32 %v1995, 0.0
        %v2035 = vmax.f32 %v1778, 0.0
        %v2036 = vmax.f32 %v1780, 0.0
        %v2037 = vmax.f32 %v1997, 0.0
        %v2038 = vmax.f32 %v1999, 0.0
        %v2039 = vmax.f32 %v1784, 0.0
        %v2040 = vmax.f32 %v1786, 0.0
        %v2041 = vmax.f32 %v2003, 0.0
        %v2042 = vmax.f32 %v2005, 0.0
        %v2043 = vmax.f32 %v1788, 0.0
        %v2044 = vmax.f32 %v1790, 0.0
        %v2045 = vmax.f32 %v2007, 0.0
        %v2046 = vmax.f32 %v2009, 0.0
        %v2047 = vmax.f32 %v1794, 0.0
        %v2048 = vmax.f32 %v1796, 0.0
        %v2049 = vmax.f32 %v2013, 0.0
        %v2050 = vmax.f32 %v2015, 0.0
        %v2051 = vmax.f32 %v1798, 0.0
        %v2052 = vmax.f32 %v1800, 0.0
        %v2053 = vmax.f32 %v2017, 0.0
        %v2054 = vmax.f32 %v2019, 0.0
        %v2055 = vmax.f32 %v1804, 0.0
        %v2056 = vmax.f32 %v1806, 0.0
        %v2057 = vmax.f32 %v2023, 0.0
        %v2058 = vmax.f32 %v2025, 0.0
        %v2059 = vmax.f32 %v1808, 0.0
        %v2060 = vmax.f32 %v1810, 0.0
        %v2061 = vmax.f32 %v2027, 0.0
        %v2062 = vmax.f32 %v2029, 0.0
        %v2063 = vpack.c.bf16 %v2035, %v2031
        %v2064 = vpack.c.bf16 %v2036, %v2032
        %v2065 = vpack.c.bf16 %v2037, %v2033
        %v2066 = vpack.c.bf16 %v2038, %v2034
        %v2067 = vpack.c.bf16 %v2043, %v2039
        %v2068 = vpack.c.bf16 %v2044, %v2040
        %v2069 = vpack.c.bf16 %v2045, %v2041
        %v2070 = vpack.c.bf16 %v2046, %v2042
        %v2071 = vpack.c.bf16 %v2051, %v2047
        %v2072 = vpack.c.bf16 %v2052, %v2048
        %v2073 = vpack.c.bf16 %v2053, %v2049
        %v2074 = vpack.c.bf16 %v2054, %v2050
        %v2075 = vpack.c.bf16 %v2059, %v2055
        %v2076 = vpack.c.bf16 %v2060, %v2056
        %v2077 = vpack.c.bf16 %v2061, %v2057
        %v2078 = vpack.c.bf16 %v2062, %v2058
        %v2079 = vld [vmem:[#allocation7] sm:$0xff]
        %v2080 = vld [vmem:[#allocation7 + $0x8] sm:$0xff]
        %v2081 = vld [vmem:[#allocation7 + $0x10] sm:$0xff]
        %v2082 = vld [vmem:[#allocation7 + $0x18] sm:$0xff]
        %v2083 = vld [vmem:[#allocation7 + $0x20] sm:$0xff]
        %v2084 = vld [vmem:[#allocation7 + $0x28] sm:$0xff]
        %v2085 = vld [vmem:[#allocation7 + $0x30] sm:$0xff]
        %v2086 = vld [vmem:[#allocation7 + $0x38] sm:$0xff]
        %v2087 = vld [vmem:[#allocation7 + $0x40] sm:$0xff]
        %v2088 = vld [vmem:[#allocation7 + $0x48] sm:$0xff]
        %v2089 = vld [vmem:[#allocation7 + $0x50] sm:$0xff]
        %v2090 = vld [vmem:[#allocation7 + $0x58] sm:$0xff]
        %v2091 = vld [vmem:[#allocation7 + $0x60] sm:$0xff]
        %v2092 = vld [vmem:[#allocation7 + $0x68] sm:$0xff]
        %v2093 = vld [vmem:[#allocation7 + $0x70] sm:$0xff]
        %v2094 = vld [vmem:[#allocation7 + $0x78] sm:$0xff]
        %v2095 = vld [vmem:[#allocation7 + $0x80] sm:$0xff]
        %v2096 = vld [vmem:[#allocation7 + $0x88] sm:$0xff]
        %v2097 = vld [vmem:[#allocation7 + $0x90] sm:$0xff]
        %v2098 = vld [vmem:[#allocation7 + $0x98] sm:$0xff]
        %v2099 = vld [vmem:[#allocation7 + $0xa0] sm:$0xff]
        %v2100 = vld [vmem:[#allocation7 + $0xa8] sm:$0xff]
        %v2101 = vld [vmem:[#allocation7 + $0xb0] sm:$0xff]
        %v2102 = vld [vmem:[#allocation7 + $0xb8] sm:$0xff]
        %v2103 = vld [vmem:[#allocation7 + $0xc0] sm:$0xff]
        %v2104 = vld [vmem:[#allocation7 + $0xc8] sm:$0xff]
        %v2105 = vld [vmem:[#allocation7 + $0xd0] sm:$0xff]
        %v2106 = vld [vmem:[#allocation7 + $0xd8] sm:$0xff]
        %v2107 = vld [vmem:[#allocation7 + $0xe0] sm:$0xff]
        %v2108 = vld [vmem:[#allocation7 + $0xe8] sm:$0xff]
        %v2109 = vld [vmem:[#allocation7 + $0xf0] sm:$0xff]
        %v2110 = vld [vmem:[#allocation7 + $0xf8] sm:$0xff]
        %v2111 = vld [vmem:[#allocation7 + $0x100] sm:$0xff]
        %v2112 = vld [vmem:[#allocation7 + $0x108] sm:$0xff]
        %v2113 = vld [vmem:[#allocation7 + $0x110] sm:$0xff]
        %v2114 = vld [vmem:[#allocation7 + $0x118] sm:$0xff]
        %v2115 = vld [vmem:[#allocation7 + $0x120] sm:$0xff]
        %v2116 = vld [vmem:[#allocation7 + $0x128] sm:$0xff]
        %v2117 = vld [vmem:[#allocation7 + $0x130] sm:$0xff]
        %v2118 = vld [vmem:[#allocation7 + $0x138] sm:$0xff]
        %v2119 = vld [vmem:[#allocation7 + $0x140] sm:$0xff]
        %v2120 = vld [vmem:[#allocation7 + $0x148] sm:$0xff]
        %v2121 = vld [vmem:[#allocation7 + $0x150] sm:$0xff]
        %v2122 = vld [vmem:[#allocation7 + $0x158] sm:$0xff]
        %v2123 = vld [vmem:[#allocation7 + $0x160] sm:$0xff]
        %v2124 = vld [vmem:[#allocation7 + $0x168] sm:$0xff]
        %v2125 = vld [vmem:[#allocation7 + $0x170] sm:$0xff]
        %v2126 = vld [vmem:[#allocation7 + $0x178] sm:$0xff]
        %v2127 = vld [vmem:[#allocation7 + $0x180] sm:$0xff]
        %v2128 = vld [vmem:[#allocation7 + $0x188] sm:$0xff]
        %v2129 = vld [vmem:[#allocation7 + $0x190] sm:$0xff]
        %v2130 = vld [vmem:[#allocation7 + $0x198] sm:$0xff]
        %v2131 = vld [vmem:[#allocation7 + $0x1a0] sm:$0xff]
        %v2132 = vld [vmem:[#allocation7 + $0x1a8] sm:$0xff]
        %v2133 = vld [vmem:[#allocation7 + $0x1b0] sm:$0xff]
        %v2134 = vld [vmem:[#allocation7 + $0x1b8] sm:$0xff]
        %v2135 = vld [vmem:[#allocation7 + $0x1c0] sm:$0xff]
        %v2136 = vld [vmem:[#allocation7 + $0x1c8] sm:$0xff]
        %v2137 = vld [vmem:[#allocation7 + $0x1d0] sm:$0xff]
        %v2138 = vld [vmem:[#allocation7 + $0x1d8] sm:$0xff]
        %v2139 = vld [vmem:[#allocation7 + $0x1e0] sm:$0xff]
        %v2140 = vld [vmem:[#allocation7 + $0x1e8] sm:$0xff]
        %v2141 = vld [vmem:[#allocation7 + $0x1f0] sm:$0xff]
        %v2142 = vld [vmem:[#allocation7 + $0x1f8] sm:$0xff]
        %v2143 = vld [vmem:[#allocation7 + $0x200] sm:$0xff]
        %v2144 = vld [vmem:[#allocation7 + $0x208] sm:$0xff]
        %v2145 = vld [vmem:[#allocation7 + $0x210] sm:$0xff]
        %v2146 = vld [vmem:[#allocation7 + $0x218] sm:$0xff]
        %v2147 = vld [vmem:[#allocation7 + $0x220] sm:$0xff]
        %v2148 = vld [vmem:[#allocation7 + $0x228] sm:$0xff]
        %v2149 = vld [vmem:[#allocation7 + $0x230] sm:$0xff]
        %v2150 = vld [vmem:[#allocation7 + $0x238] sm:$0xff]
        %v2151 = vld [vmem:[#allocation7 + $0x240] sm:$0xff]
        %v2152 = vld [vmem:[#allocation7 + $0x248] sm:$0xff]
        %v2153 = vld [vmem:[#allocation7 + $0x250] sm:$0xff]
        %v2154 = vld [vmem:[#allocation7 + $0x258] sm:$0xff]
        %v2155 = vld [vmem:[#allocation7 + $0x260] sm:$0xff]
        %v2156 = vld [vmem:[#allocation7 + $0x268] sm:$0xff]
        %v2157 = vld [vmem:[#allocation7 + $0x270] sm:$0xff]
        %v2158 = vld [vmem:[#allocation7 + $0x278] sm:$0xff]
        %v2159 = vld [vmem:[#allocation7 + $0x280] sm:$0xff]
        %v2160 = vld [vmem:[#allocation7 + $0x288] sm:$0xff]
        %v2161 = vld [vmem:[#allocation7 + $0x290] sm:$0xff]
        %v2162 = vld [vmem:[#allocation7 + $0x298] sm:$0xff]
        %v2163 = vld [vmem:[#allocation7 + $0x2a0] sm:$0xff]
        %v2164 = vld [vmem:[#allocation7 + $0x2a8] sm:$0xff]
        %v2165 = vld [vmem:[#allocation7 + $0x2b0] sm:$0xff]
        %v2166 = vld [vmem:[#allocation7 + $0x2b8] sm:$0xff]
        %v2167 = vld [vmem:[#allocation7 + $0x2c0] sm:$0xff]
        %v2168 = vld [vmem:[#allocation7 + $0x2c8] sm:$0xff]
        %v2169 = vld [vmem:[#allocation7 + $0x2d0] sm:$0xff]
        %v2170 = vld [vmem:[#allocation7 + $0x2d8] sm:$0xff]
        %v2171 = vld [vmem:[#allocation7 + $0x2e0] sm:$0xff]
        %v2172 = vld [vmem:[#allocation7 + $0x2e8] sm:$0xff]
        %v2173 = vld [vmem:[#allocation7 + $0x2f0] sm:$0xff]
        %v2174 = vld [vmem:[#allocation7 + $0x2f8] sm:$0xff]
        %v2175 = vld [vmem:[#allocation7 + $0x300] sm:$0xff]
        %v2176 = vld [vmem:[#allocation7 + $0x308] sm:$0xff]
        %v2177 = vld [vmem:[#allocation7 + $0x310] sm:$0xff]
        %v2178 = vld [vmem:[#allocation7 + $0x318] sm:$0xff]
        %v2179 = vld [vmem:[#allocation7 + $0x320] sm:$0xff]
        %v2180 = vld [vmem:[#allocation7 + $0x328] sm:$0xff]
        %v2181 = vld [vmem:[#allocation7 + $0x330] sm:$0xff]
        %v2182 = vld [vmem:[#allocation7 + $0x338] sm:$0xff]
        %v2183 = vld [vmem:[#allocation7 + $0x340] sm:$0xff]
        %v2184 = vld [vmem:[#allocation7 + $0x348] sm:$0xff]
        %v2185 = vld [vmem:[#allocation7 + $0x350] sm:$0xff]
        %v2186 = vld [vmem:[#allocation7 + $0x358] sm:$0xff]
        %v2187 = vld [vmem:[#allocation7 + $0x360] sm:$0xff]
        %v2188 = vld [vmem:[#allocation7 + $0x368] sm:$0xff]
        %v2189 = vld [vmem:[#allocation7 + $0x370] sm:$0xff]
        %v2190 = vld [vmem:[#allocation7 + $0x378] sm:$0xff]
        %v2191 = vld [vmem:[#allocation7 + $0x380] sm:$0xff]
        %v2192 = vld [vmem:[#allocation7 + $0x388] sm:$0xff]
        %v2193 = vld [vmem:[#allocation7 + $0x390] sm:$0xff]
        %v2194 = vld [vmem:[#allocation7 + $0x398] sm:$0xff]
        %v2195 = vld [vmem:[#allocation7 + $0x3a0] sm:$0xff]
        %v2196 = vld [vmem:[#allocation7 + $0x3a8] sm:$0xff]
        %v2197 = vld [vmem:[#allocation7 + $0x3b0] sm:$0xff]
        %v2198 = vld [vmem:[#allocation7 + $0x3b8] sm:$0xff]
        %v2199 = vld [vmem:[#allocation7 + $0x3c0] sm:$0xff]
        %v2200 = vld [vmem:[#allocation7 + $0x3c8] sm:$0xff]
        %v2201 = vld [vmem:[#allocation7 + $0x3d0] sm:$0xff]
        %v2202 = vld [vmem:[#allocation7 + $0x3d8] sm:$0xff]
        %v2203 = vld [vmem:[#allocation7 + $0x3e0] sm:$0xff]
        %v2204 = vld [vmem:[#allocation7 + $0x3e8] sm:$0xff]
        %v2205 = vld [vmem:[#allocation7 + $0x3f0] sm:$0xff]
        %v2206 = vld [vmem:[#allocation7 + $0x3f8] sm:$0xff]
        %v2207 = vld [vmem:[%s4] sm:$0xf]
        %v2209 = vlaneseq
        %v2210 = vshrl.u32 %v2209, 7
        %v2211 = vsub.s32 0, %v2210
        %v2212 = vrot.slane %v2207, %v2211
        %v2213 = vlaneseq
        %v2214 = vshrl.u32 %v2213, 7
        %v2215 = vsub.s32 1, %v2214
        %v2216 = vrot.slane %v2207, %v2215
        %v2217 = vlaneseq
        %v2218 = vshrl.u32 %v2217, 7
        %v2219 = vsub.s32 2, %v2218
        %v2220 = vrot.slane %v2207, %v2219
        %v2221 = vlaneseq
        %v2222 = vshrl.u32 %v2221, 7
        %v2223 = vsub.s32 3, %v2222
        %v2224 = vrot.slane %v2207, %v2223
        %v2357 = vunpack.c.l.b16 %v2079
        %v2358 = vunpack.c.h.b16 %v2079
        %v2359 = vunpack.c.l.b16 %v2080
        %v2360 = vunpack.c.h.b16 %v2080
        %v2361 = vunpack.c.l.b16 %v2081
        %v2362 = vunpack.c.h.b16 %v2081
        %v2363 = vunpack.c.l.b16 %v2082
        %v2364 = vunpack.c.h.b16 %v2082
        %v2365 = vunpack.c.l.b16 %v2083
        %v2366 = vunpack.c.h.b16 %v2083
        %v2367 = vunpack.c.l.b16 %v2084
        %v2368 = vunpack.c.h.b16 %v2084
        %v2369 = vunpack.c.l.b16 %v2085
        %v2370 = vunpack.c.h.b16 %v2085
        %v2371 = vunpack.c.l.b16 %v2086
        %v2372 = vunpack.c.h.b16 %v2086
        %v2373 = vunpack.c.l.b16 %v2087
        %v2374 = vunpack.c.h.b16 %v2087
        %v2375 = vunpack.c.l.b16 %v2088
        %v2376 = vunpack.c.h.b16 %v2088
        %v2377 = vunpack.c.l.b16 %v2089
        %v2378 = vunpack.c.h.b16 %v2089
        %v2379 = vunpack.c.l.b16 %v2090
        %v2380 = vunpack.c.h.b16 %v2090
        %v2381 = vunpack.c.l.b16 %v2091
        %v2382 = vunpack.c.h.b16 %v2091
        %v2383 = vunpack.c.l.b16 %v2092
        %v2384 = vunpack.c.h.b16 %v2092
        %v2385 = vunpack.c.l.b16 %v2093
        %v2386 = vunpack.c.h.b16 %v2093
        %v2387 = vunpack.c.l.b16 %v2094
        %v2388 = vunpack.c.h.b16 %v2094
        %v2389 = vunpack.c.l.b16 %v2095
        %v2390 = vunpack.c.h.b16 %v2095
        %v2391 = vunpack.c.l.b16 %v2096
        %v2392 = vunpack.c.h.b16 %v2096
        %v2393 = vunpack.c.l.b16 %v2097
        %v2394 = vunpack.c.h.b16 %v2097
        %v2395 = vunpack.c.l.b16 %v2098
        %v2396 = vunpack.c.h.b16 %v2098
        %v2397 = vunpack.c.l.b16 %v2099
        %v2398 = vunpack.c.h.b16 %v2099
        %v2399 = vunpack.c.l.b16 %v2100
        %v2400 = vunpack.c.h.b16 %v2100
        %v2401 = vunpack.c.l.b16 %v2101
        %v2402 = vunpack.c.h.b16 %v2101
        %v2403 = vunpack.c.l.b16 %v2102
        %v2404 = vunpack.c.h.b16 %v2102
        %v2405 = vunpack.c.l.b16 %v2103
        %v2406 = vunpack.c.h.b16 %v2103
        %v2407 = vunpack.c.l.b16 %v2104
        %v2408 = vunpack.c.h.b16 %v2104
        %v2409 = vunpack.c.l.b16 %v2105
        %v2410 = vunpack.c.h.b16 %v2105
        %v2411 = vunpack.c.l.b16 %v2106
        %v2412 = vunpack.c.h.b16 %v2106
        %v2413 = vunpack.c.l.b16 %v2107
        %v2414 = vunpack.c.h.b16 %v2107
        %v2415 = vunpack.c.l.b16 %v2108
        %v2416 = vunpack.c.h.b16 %v2108
        %v2417 = vunpack.c.l.b16 %v2109
        %v2418 = vunpack.c.h.b16 %v2109
        %v2419 = vunpack.c.l.b16 %v2110
        %v2420 = vunpack.c.h.b16 %v2110
        %v2421 = vunpack.c.l.b16 %v2111
        %v2422 = vunpack.c.h.b16 %v2111
        %v2423 = vunpack.c.l.b16 %v2112
        %v2424 = vunpack.c.h.b16 %v2112
        %v2425 = vunpack.c.l.b16 %v2113
        %v2426 = vunpack.c.h.b16 %v2113
        %v2427 = vunpack.c.l.b16 %v2114
        %v2428 = vunpack.c.h.b16 %v2114
        %v2429 = vunpack.c.l.b16 %v2115
        %v2430 = vunpack.c.h.b16 %v2115
        %v2431 = vunpack.c.l.b16 %v2116
        %v2432 = vunpack.c.h.b16 %v2116
        %v2433 = vunpack.c.l.b16 %v2117
        %v2434 = vunpack.c.h.b16 %v2117
        %v2435 = vunpack.c.l.b16 %v2118
        %v2436 = vunpack.c.h.b16 %v2118
        %v2437 = vunpack.c.l.b16 %v2119
        %v2438 = vunpack.c.h.b16 %v2119
        %v2439 = vunpack.c.l.b16 %v2120
        %v2440 = vunpack.c.h.b16 %v2120
        %v2441 = vunpack.c.l.b16 %v2121
        %v2442 = vunpack.c.h.b16 %v2121
        %v2443 = vunpack.c.l.b16 %v2122
        %v2444 = vunpack.c.h.b16 %v2122
        %v2445 = vunpack.c.l.b16 %v2123
        %v2446 = vunpack.c.h.b16 %v2123
        %v2447 = vunpack.c.l.b16 %v2124
        %v2448 = vunpack.c.h.b16 %v2124
        %v2449 = vunpack.c.l.b16 %v2125
        %v2450 = vunpack.c.h.b16 %v2125
        %v2451 = vunpack.c.l.b16 %v2126
        %v2452 = vunpack.c.h.b16 %v2126
        %v2453 = vunpack.c.l.b16 %v2127
        %v2454 = vunpack.c.h.b16 %v2127
        %v2455 = vunpack.c.l.b16 %v2128
        %v2456 = vunpack.c.h.b16 %v2128
        %v2457 = vunpack.c.l.b16 %v2129
        %v2458 = vunpack.c.h.b16 %v2129
        %v2459 = vunpack.c.l.b16 %v2130
        %v2460 = vunpack.c.h.b16 %v2130
        %v2461 = vunpack.c.l.b16 %v2131
        %v2462 = vunpack.c.h.b16 %v2131
        %v2463 = vunpack.c.l.b16 %v2132
        %v2464 = vunpack.c.h.b16 %v2132
        %v2465 = vunpack.c.l.b16 %v2133
        %v2466 = vunpack.c.h.b16 %v2133
        %v2467 = vunpack.c.l.b16 %v2134
        %v2468 = vunpack.c.h.b16 %v2134
        %v2469 = vunpack.c.l.b16 %v2135
        %v2470 = vunpack.c.h.b16 %v2135
        %v2471 = vunpack.c.l.b16 %v2136
        %v2472 = vunpack.c.h.b16 %v2136
        %v2473 = vunpack.c.l.b16 %v2137
        %v2474 = vunpack.c.h.b16 %v2137
        %v2475 = vunpack.c.l.b16 %v2138
        %v2476 = vunpack.c.h.b16 %v2138
        %v2477 = vunpack.c.l.b16 %v2139
        %v2478 = vunpack.c.h.b16 %v2139
        %v2479 = vunpack.c.l.b16 %v2140
        %v2480 = vunpack.c.h.b16 %v2140
        %v2481 = vunpack.c.l.b16 %v2141
        %v2482 = vunpack.c.h.b16 %v2141
        %v2483 = vunpack.c.l.b16 %v2142
        %v2484 = vunpack.c.h.b16 %v2142
        %v2485 = vunpack.c.l.b16 %v2143
        %v2486 = vunpack.c.h.b16 %v2143
        %v2487 = vunpack.c.l.b16 %v2144
        %v2488 = vunpack.c.h.b16 %v2144
        %v2489 = vunpack.c.l.b16 %v2145
        %v2490 = vunpack.c.h.b16 %v2145
        %v2491 = vunpack.c.l.b16 %v2146
        %v2492 = vunpack.c.h.b16 %v2146
        %v2493 = vunpack.c.l.b16 %v2147
        %v2494 = vunpack.c.h.b16 %v2147
        %v2495 = vunpack.c.l.b16 %v2148
        %v2496 = vunpack.c.h.b16 %v2148
        %v2497 = vunpack.c.l.b16 %v2149
        %v2498 = vunpack.c.h.b16 %v2149
        %v2499 = vunpack.c.l.b16 %v2150
        %v2500 = vunpack.c.h.b16 %v2150
        %v2501 = vunpack.c.l.b16 %v2151
        %v2502 = vunpack.c.h.b16 %v2151
        %v2503 = vunpack.c.l.b16 %v2152
        %v2504 = vunpack.c.h.b16 %v2152
        %v2505 = vunpack.c.l.b16 %v2153
        %v2506 = vunpack.c.h.b16 %v2153
        %v2507 = vunpack.c.l.b16 %v2154
        %v2508 = vunpack.c.h.b16 %v2154
        %v2509 = vunpack.c.l.b16 %v2155
        %v2510 = vunpack.c.h.b16 %v2155
        %v2511 = vunpack.c.l.b16 %v2156
        %v2512 = vunpack.c.h.b16 %v2156
        %v2513 = vunpack.c.l.b16 %v2157
        %v2514 = vunpack.c.h.b16 %v2157
        %v2515 = vunpack.c.l.b16 %v2158
        %v2516 = vunpack.c.h.b16 %v2158
        %v2517 = vunpack.c.l.b16 %v2159
        %v2518 = vunpack.c.h.b16 %v2159
        %v2519 = vunpack.c.l.b16 %v2160
        %v2520 = vunpack.c.h.b16 %v2160
        %v2521 = vunpack.c.l.b16 %v2161
        %v2522 = vunpack.c.h.b16 %v2161
        %v2523 = vunpack.c.l.b16 %v2162
        %v2524 = vunpack.c.h.b16 %v2162
        %v2525 = vunpack.c.l.b16 %v2163
        %v2526 = vunpack.c.h.b16 %v2163
        %v2527 = vunpack.c.l.b16 %v2164
        %v2528 = vunpack.c.h.b16 %v2164
        %v2529 = vunpack.c.l.b16 %v2165
        %v2530 = vunpack.c.h.b16 %v2165
        %v2531 = vunpack.c.l.b16 %v2166
        %v2532 = vunpack.c.h.b16 %v2166
        %v2533 = vunpack.c.l.b16 %v2167
        %v2534 = vunpack.c.h.b16 %v2167
        %v2535 = vunpack.c.l.b16 %v2168
        %v2536 = vunpack.c.h.b16 %v2168
        %v2537 = vunpack.c.l.b16 %v2169
        %v2538 = vunpack.c.h.b16 %v2169
        %v2539 = vunpack.c.l.b16 %v2170
        %v2540 = vunpack.c.h.b16 %v2170
        %v2541 = vunpack.c.l.b16 %v2171
        %v2542 = vunpack.c.h.b16 %v2171
        %v2543 = vunpack.c.l.b16 %v2172
        %v2544 = vunpack.c.h.b16 %v2172
        %v2545 = vunpack.c.l.b16 %v2173
        %v2546 = vunpack.c.h.b16 %v2173
        %v2547 = vunpack.c.l.b16 %v2174
        %v2548 = vunpack.c.h.b16 %v2174
        %v2549 = vunpack.c.l.b16 %v2175
        %v2550 = vunpack.c.h.b16 %v2175
        %v2551 = vunpack.c.l.b16 %v2176
        %v2552 = vunpack.c.h.b16 %v2176
        %v2553 = vunpack.c.l.b16 %v2177
        %v2554 = vunpack.c.h.b16 %v2177
        %v2555 = vunpack.c.l.b16 %v2178
        %v2556 = vunpack.c.h.b16 %v2178
        %v2557 = vunpack.c.l.b16 %v2179
        %v2558 = vunpack.c.h.b16 %v2179
        %v2559 = vunpack.c.l.b16 %v2180
        %v2560 = vunpack.c.h.b16 %v2180
        %v2561 = vunpack.c.l.b16 %v2181
        %v2562 = vunpack.c.h.b16 %v2181
        %v2563 = vunpack.c.l.b16 %v2182
        %v2564 = vunpack.c.h.b16 %v2182
        %v2565 = vunpack.c.l.b16 %v2183
        %v2566 = vunpack.c.h.b16 %v2183
        %v2567 = vunpack.c.l.b16 %v2184
        %v2568 = vunpack.c.h.b16 %v2184
        %v2569 = vunpack.c.l.b16 %v2185
        %v2570 = vunpack.c.h.b16 %v2185
        %v2571 = vunpack.c.l.b16 %v2186
        %v2572 = vunpack.c.h.b16 %v2186
        %v2573 = vunpack.c.l.b16 %v2187
        %v2574 = vunpack.c.h.b16 %v2187
        %v2575 = vunpack.c.l.b16 %v2188
        %v2576 = vunpack.c.h.b16 %v2188
        %v2577 = vunpack.c.l.b16 %v2189
        %v2578 = vunpack.c.h.b16 %v2189
        %v2579 = vunpack.c.l.b16 %v2190
        %v2580 = vunpack.c.h.b16 %v2190
        %v2581 = vunpack.c.l.b16 %v2191
        %v2582 = vunpack.c.h.b16 %v2191
        %v2583 = vunpack.c.l.b16 %v2192
        %v2584 = vunpack.c.h.b16 %v2192
        %v2585 = vunpack.c.l.b16 %v2193
        %v2586 = vunpack.c.h.b16 %v2193
        %v2587 = vunpack.c.l.b16 %v2194
        %v2588 = vunpack.c.h.b16 %v2194
        %v2589 = vunpack.c.l.b16 %v2195
        %v2590 = vunpack.c.h.b16 %v2195
        %v2591 = vunpack.c.l.b16 %v2196
        %v2592 = vunpack.c.h.b16 %v2196
        %v2593 = vunpack.c.l.b16 %v2197
        %v2594 = vunpack.c.h.b16 %v2197
        %v2595 = vunpack.c.l.b16 %v2198
        %v2596 = vunpack.c.h.b16 %v2198
        %v2597 = vunpack.c.l.b16 %v2199
        %v2598 = vunpack.c.h.b16 %v2199
        %v2599 = vunpack.c.l.b16 %v2200
        %v2600 = vunpack.c.h.b16 %v2200
        %v2601 = vunpack.c.l.b16 %v2201
        %v2602 = vunpack.c.h.b16 %v2201
        %v2603 = vunpack.c.l.b16 %v2202
        %v2604 = vunpack.c.h.b16 %v2202
        %v2605 = vunpack.c.l.b16 %v2203
        %v2606 = vunpack.c.h.b16 %v2203
        %v2607 = vunpack.c.l.b16 %v2204
        %v2608 = vunpack.c.h.b16 %v2204
        %v2609 = vunpack.c.l.b16 %v2205
        %v2610 = vunpack.c.h.b16 %v2205
        %v2611 = vunpack.c.l.b16 %v2206
        %v2612 = vunpack.c.h.b16 %v2206
        %v2613 = vpack.c.b16 %v2361, %v2357
        %v2614 = vpack.c.b16 %v2362, %v2358
        %v2615 = vpack.c.b16 %v2363, %v2359
        %v2616 = vpack.c.b16 %v2364, %v2360
        %v2617 = vpack.c.b16 %v2369, %v2365
        %v2618 = vpack.c.b16 %v2370, %v2366
        %v2619 = vpack.c.b16 %v2371, %v2367
        %v2620 = vpack.c.b16 %v2372, %v2368
        %v2621 = vpack.c.b16 %v2377, %v2373
        %v2622 = vpack.c.b16 %v2378, %v2374
        %v2623 = vpack.c.b16 %v2379, %v2375
        %v2624 = vpack.c.b16 %v2380, %v2376
        %v2625 = vpack.c.b16 %v2385, %v2381
        %v2626 = vpack.c.b16 %v2386, %v2382
        %v2627 = vpack.c.b16 %v2387, %v2383
        %v2628 = vpack.c.b16 %v2388, %v2384
        %v2629 = vpack.c.b16 %v2393, %v2389
        %v2630 = vpack.c.b16 %v2394, %v2390
        %v2631 = vpack.c.b16 %v2395, %v2391
        %v2632 = vpack.c.b16 %v2396, %v2392
        %v2633 = vpack.c.b16 %v2401, %v2397
        %v2634 = vpack.c.b16 %v2402, %v2398
        %v2635 = vpack.c.b16 %v2403, %v2399
        %v2636 = vpack.c.b16 %v2404, %v2400
        %v2637 = vpack.c.b16 %v2409, %v2405
        %v2638 = vpack.c.b16 %v2410, %v2406
        %v2639 = vpack.c.b16 %v2411, %v2407
        %v2640 = vpack.c.b16 %v2412, %v2408
        %v2641 = vpack.c.b16 %v2417, %v2413
        %v2642 = vpack.c.b16 %v2418, %v2414
        %v2643 = vpack.c.b16 %v2419, %v2415
        %v2644 = vpack.c.b16 %v2420, %v2416
        %v2645 = vpack.c.b16 %v2425, %v2421
        %v2646 = vpack.c.b16 %v2426, %v2422
        %v2647 = vpack.c.b16 %v2427, %v2423
        %v2648 = vpack.c.b16 %v2428, %v2424
        %v2649 = vpack.c.b16 %v2433, %v2429
        %v2650 = vpack.c.b16 %v2434, %v2430
        %v2651 = vpack.c.b16 %v2435, %v2431
        %v2652 = vpack.c.b16 %v2436, %v2432
        %v2653 = vpack.c.b16 %v2441, %v2437
        %v2654 = vpack.c.b16 %v2442, %v2438
        %v2655 = vpack.c.b16 %v2443, %v2439
        %v2656 = vpack.c.b16 %v2444, %v2440
        %v2657 = vpack.c.b16 %v2449, %v2445
        %v2658 = vpack.c.b16 %v2450, %v2446
        %v2659 = vpack.c.b16 %v2451, %v2447
        %v2660 = vpack.c.b16 %v2452, %v2448
        %v2661 = vpack.c.b16 %v2457, %v2453
        %v2662 = vpack.c.b16 %v2458, %v2454
        %v2663 = vpack.c.b16 %v2459, %v2455
        %v2664 = vpack.c.b16 %v2460, %v2456
        %v2665 = vpack.c.b16 %v2465, %v2461
        %v2666 = vpack.c.b16 %v2466, %v2462
        %v2667 = vpack.c.b16 %v2467, %v2463
        %v2668 = vpack.c.b16 %v2468, %v2464
        %v2669 = vpack.c.b16 %v2473, %v2469
        %v2670 = vpack.c.b16 %v2474, %v2470
        %v2671 = vpack.c.b16 %v2475, %v2471
        %v2672 = vpack.c.b16 %v2476, %v2472
        %v2673 = vpack.c.b16 %v2481, %v2477
        %v2674 = vpack.c.b16 %v2482, %v2478
        %v2675 = vpack.c.b16 %v2483, %v2479
        %v2676 = vpack.c.b16 %v2484, %v2480
        %v2677 = vpack.c.b16 %v2489, %v2485
        %v2678 = vpack.c.b16 %v2490, %v2486
        %v2679 = vpack.c.b16 %v2491, %v2487
        %v2680 = vpack.c.b16 %v2492, %v2488
        %v2681 = vpack.c.b16 %v2497, %v2493
        %v2682 = vpack.c.b16 %v2498, %v2494
        %v2683 = vpack.c.b16 %v2499, %v2495
        %v2684 = vpack.c.b16 %v2500, %v2496
        %v2685 = vpack.c.b16 %v2505, %v2501
        %v2686 = vpack.c.b16 %v2506, %v2502
        %v2687 = vpack.c.b16 %v2507, %v2503
        %v2688 = vpack.c.b16 %v2508, %v2504
        %v2689 = vpack.c.b16 %v2513, %v2509
        %v2690 = vpack.c.b16 %v2514, %v2510
        %v2691 = vpack.c.b16 %v2515, %v2511
        %v2692 = vpack.c.b16 %v2516, %v2512
        %v2693 = vpack.c.b16 %v2521, %v2517
        %v2694 = vpack.c.b16 %v2522, %v2518
        %v2695 = vpack.c.b16 %v2523, %v2519
        %v2696 = vpack.c.b16 %v2524, %v2520
        %v2697 = vpack.c.b16 %v2529, %v2525
        %v2698 = vpack.c.b16 %v2530, %v2526
        %v2699 = vpack.c.b16 %v2531, %v2527
        %v2700 = vpack.c.b16 %v2532, %v2528
        %v2701 = vpack.c.b16 %v2537, %v2533
        %v2702 = vpack.c.b16 %v2538, %v2534
        %v2703 = vpack.c.b16 %v2539, %v2535
        %v2704 = vpack.c.b16 %v2540, %v2536
        %v2705 = vpack.c.b16 %v2545, %v2541
        %v2706 = vpack.c.b16 %v2546, %v2542
        %v2707 = vpack.c.b16 %v2547, %v2543
        %v2708 = vpack.c.b16 %v2548, %v2544
        %v2709 = vpack.c.b16 %v2553, %v2549
        %v2710 = vpack.c.b16 %v2554, %v2550
        %v2711 = vpack.c.b16 %v2555, %v2551
        %v2712 = vpack.c.b16 %v2556, %v2552
        %v2713 = vpack.c.b16 %v2561, %v2557
        %v2714 = vpack.c.b16 %v2562, %v2558
        %v2715 = vpack.c.b16 %v2563, %v2559
        %v2716 = vpack.c.b16 %v2564, %v2560
        %v2717 = vpack.c.b16 %v2569, %v2565
        %v2718 = vpack.c.b16 %v2570, %v2566
        %v2719 = vpack.c.b16 %v2571, %v2567
        %v2720 = vpack.c.b16 %v2572, %v2568
        %v2721 = vpack.c.b16 %v2577, %v2573
        %v2722 = vpack.c.b16 %v2578, %v2574
        %v2723 = vpack.c.b16 %v2579, %v2575
        %v2724 = vpack.c.b16 %v2580, %v2576
        %v2725 = vpack.c.b16 %v2585, %v2581
        %v2726 = vpack.c.b16 %v2586, %v2582
        %v2727 = vpack.c.b16 %v2587, %v2583
        %v2728 = vpack.c.b16 %v2588, %v2584
        %v2729 = vpack.c.b16 %v2593, %v2589
        %v2730 = vpack.c.b16 %v2594, %v2590
        %v2731 = vpack.c.b16 %v2595, %v2591
        %v2732 = vpack.c.b16 %v2596, %v2592
        %v2733 = vpack.c.b16 %v2601, %v2597
        %v2734 = vpack.c.b16 %v2602, %v2598
        %v2735 = vpack.c.b16 %v2603, %v2599
        %v2736 = vpack.c.b16 %v2604, %v2600
        %v2737 = vpack.c.b16 %v2609, %v2605
        %v2738 = vpack.c.b16 %v2610, %v2606
        %v2739 = vpack.c.b16 %v2611, %v2607
        %v2740 = vpack.c.b16 %v2612, %v2608
        %2869 = vmatprep.subr.bf16.mxu0 %v2614
        %2870 = vmatpush1.bf16.msra.mxu0 %v2613
        %2871 = vmatprep.subr.bf16.mxu0 %v2618
        %2872 = vmatpush1.bf16.msra.mxu0 %v2617
        %2873 = vmatprep.subr.bf16.mxu0 %v2622
        %2874 = vmatpush1.bf16.msra.mxu0 %v2621
        %2875 = vmatprep.subr.bf16.mxu0 %v2626
        %2876 = vmatpush1.bf16.msra.mxu0 %v2625
        %2877 = vmatprep.subr.bf16.mxu0 %v2630
        %2878 = vmatpush1.bf16.msra.mxu0 %v2629
        %2879 = vmatprep.subr.bf16.mxu0 %v2634
        %2880 = vmatpush1.bf16.msra.mxu0 %v2633
        %2881 = vmatprep.subr.bf16.mxu0 %v2638
        %2882 = vmatpush1.bf16.msra.mxu0 %v2637
        %2883 = vmatprep.subr.bf16.mxu0 %v2642
        %2884 = vmatpush1.bf16.msra.mxu0 %v2641
        %2885 = vmatprep.subr.bf16.mxu0 %v2646
        %2886 = vmatpush1.bf16.msra.mxu0 %v2645
        %2887 = vmatprep.subr.bf16.mxu0 %v2650
        %2888 = vmatpush1.bf16.msra.mxu0 %v2649
        %2889 = vmatprep.subr.bf16.mxu0 %v2654
        %2890 = vmatpush1.bf16.msra.mxu0 %v2653
        %2891 = vmatprep.subr.bf16.mxu0 %v2658
        %2892 = vmatpush1.bf16.msra.mxu0 %v2657
        %2893 = vmatprep.subr.bf16.mxu0 %v2662
        %2894 = vmatpush1.bf16.msra.mxu0 %v2661
        %2895 = vmatprep.subr.bf16.mxu0 %v2666
        %2896 = vmatpush1.bf16.msra.mxu0 %v2665
        %2897 = vmatprep.subr.bf16.mxu0 %v2670
        %2898 = vmatpush1.bf16.msra.mxu0 %v2669
        %2899 = vmatprep.subr.bf16.mxu0 %v2674
        %2900 = vmatpush1.bf16.msra.mxu0 %v2673
        %2901 = vmatprep.mubr.bf16.mxu0 %v2064
        %2902 = vmatmul.mubr.bf16.gmra.mrb[0].mxu0 %v2063
        %v2903 = vpop.f32.mrb[0].mxu0
        %v2904 = vadd.f32 %v2212, %v2903
        %v2905 = vpop.f32.mrb[0].mxu0
        %v2906 = vadd.f32 %v2216, %v2905
        %v2907 = vpop.f32.mrb[0].mxu0
        %v2908 = vadd.f32 %v2212, %v2907
        %v2909 = vpop.f32.mrb[0].mxu0
        %v2910 = vadd.f32 %v2216, %v2909
        %2911 = vmatprep.mubr.bf16.mxu0 %v2068
        %2912 = vmatmul.mubr.bf16.gmra.mrb[0].mxu0 %v2067
        %v2913 = vpop.f32.mrb[0].mxu0
        %v2914 = vadd.f32 %v2212, %v2913
        %v2915 = vpop.f32.mrb[0].mxu0
        %v2916 = vadd.f32 %v2216, %v2915
        %v2917 = vpop.f32.mrb[0].mxu0
        %v2918 = vadd.f32 %v2212, %v2917
        %v2919 = vpop.f32.mrb[0].mxu0
        %v2920 = vadd.f32 %v2216, %v2919
        %2921 = vmatprep.mubr.bf16.mxu0 %v2072
        %2922 = vmatmul.mubr.bf16.gmra.mrb[0].mxu0 %v2071
        %v2923 = vpop.f32.mrb[0].mxu0
        %v2924 = vadd.f32 %v2212, %v2923
        %v2925 = vpop.f32.mrb[0].mxu0
        %v2926 = vadd.f32 %v2216, %v2925
        %v2927 = vpop.f32.mrb[0].mxu0
        %v2928 = vadd.f32 %v2212, %v2927
        %v2929 = vpop.f32.mrb[0].mxu0
        %v2930 = vadd.f32 %v2216, %v2929
        %2931 = vmatprep.mubr.bf16.mxu0 %v2076
        %2932 = vmatmul.mubr.bf16.gmra.mrb[0].mxu0 %v2075
        %v2933 = vpop.f32.mrb[0].mxu0
        %v2934 = vadd.f32 %v2212, %v2933
        %v2935 = vpop.f32.mrb[0].mxu0
        %v2936 = vadd.f32 %v2216, %v2935
        %v2937 = vpop.f32.mrb[0].mxu0
        %v2938 = vadd.f32 %v2212, %v2937
        %v2939 = vpop.f32.mrb[0].mxu0
        %v2940 = vadd.f32 %v2216, %v2939
        %2941 = vdwg.mxu0
        %2942 = vmatprep.subr.bf16.mxu0 %v2678
        %2943 = vmatpush1.bf16.msra.mxu0 %v2677
        %2944 = vmatprep.subr.bf16.mxu0 %v2682
        %2945 = vmatpush1.bf16.msra.mxu0 %v2681
        %2946 = vmatprep.subr.bf16.mxu0 %v2686
        %2947 = vmatpush1.bf16.msra.mxu0 %v2685
        %2948 = vmatprep.subr.bf16.mxu0 %v2690
        %2949 = vmatpush1.bf16.msra.mxu0 %v2689
        %2950 = vmatprep.subr.bf16.mxu0 %v2694
        %2951 = vmatpush1.bf16.msra.mxu0 %v2693
        %2952 = vmatprep.subr.bf16.mxu0 %v2698
        %2953 = vmatpush1.bf16.msra.mxu0 %v2697
        %2954 = vmatprep.subr.bf16.mxu0 %v2702
        %2955 = vmatpush1.bf16.msra.mxu0 %v2701
        %2956 = vmatprep.subr.bf16.mxu0 %v2706
        %2957 = vmatpush1.bf16.msra.mxu0 %v2705
        %2958 = vmatprep.subr.bf16.mxu0 %v2710
        %2959 = vmatpush1.bf16.msra.mxu0 %v2709
        %2960 = vmatprep.subr.bf16.mxu0 %v2714
        %2961 = vmatpush1.bf16.msra.mxu0 %v2713
        %2962 = vmatprep.subr.bf16.mxu0 %v2718
        %2963 = vmatpush1.bf16.msra.mxu0 %v2717
        %2964 = vmatprep.subr.bf16.mxu0 %v2722
        %2965 = vmatpush1.bf16.msra.mxu0 %v2721
        %2966 = vmatprep.subr.bf16.mxu0 %v2726
        %2967 = vmatpush1.bf16.msra.mxu0 %v2725
        %2968 = vmatprep.subr.bf16.mxu0 %v2730
        %2969 = vmatpush1.bf16.msra.mxu0 %v2729
        %2970 = vmatprep.subr.bf16.mxu0 %v2734
        %2971 = vmatpush1.bf16.msra.mxu0 %v2733
        %2972 = vmatprep.subr.bf16.mxu0 %v2738
        %2973 = vmatpush1.bf16.msra.mxu0 %v2737
        %2974 = vmatprep.mubr.bf16.mxu0 %v2066
        %2975 = vmatmul.mubr.bf16.gmra.mrb[0].mxu0 %v2065
        %v2976 = vpop.f32.mrb[0].mxu0
        %v2977 = vadd.f32 %v2904, %v2976
        %v2978 = vpop.f32.mrb[0].mxu0
        %v2979 = vadd.f32 %v2906, %v2978
        %v2980 = vpop.f32.mrb[0].mxu0
        %v2981 = vadd.f32 %v2908, %v2980
        %v2982 = vpop.f32.mrb[0].mxu0
        %v2983 = vadd.f32 %v2910, %v2982
        %2984 = vmatprep.mubr.bf16.mxu0 %v2070
        %2985 = vmatmul.mubr.bf16.gmra.mrb[0].mxu0 %v2069
        %v2986 = vpop.f32.mrb[0].mxu0
        %v2987 = vadd.f32 %v2914, %v2986
        %v2988 = vpop.f32.mrb[0].mxu0
        %v2989 = vadd.f32 %v2916, %v2988
        %v2990 = vpop.f32.mrb[0].mxu0
        %v2991 = vadd.f32 %v2918, %v2990
        %v2992 = vpop.f32.mrb[0].mxu0
        %v2993 = vadd.f32 %v2920, %v2992
        %2994 = vmatprep.mubr.bf16.mxu0 %v2074
        %2995 = vmatmul.mubr.bf16.gmra.mrb[0].mxu0 %v2073
        %v2996 = vpop.f32.mrb[0].mxu0
        %v2997 = vadd.f32 %v2924, %v2996
        %v2998 = vpop.f32.mrb[0].mxu0
        %v2999 = vadd.f32 %v2926, %v2998
        %v3000 = vpop.f32.mrb[0].mxu0
        %v3001 = vadd.f32 %v2928, %v3000
        %v3002 = vpop.f32.mrb[0].mxu0
        %v3003 = vadd.f32 %v2930, %v3002
        %3004 = vmatprep.mubr.bf16.mxu0 %v2078
        %3005 = vmatmul.mubr.bf16.gmra.mrb[0].mxu0 %v2077
        %v3006 = vpop.f32.mrb[0].mxu0
        %v3007 = vadd.f32 %v2934, %v3006
        %v3008 = vpop.f32.mrb[0].mxu0
        %v3009 = vadd.f32 %v2936, %v3008
        %v3010 = vpop.f32.mrb[0].mxu0
        %v3011 = vadd.f32 %v2938, %v3010
        %v3012 = vpop.f32.mrb[0].mxu0
        %v3013 = vadd.f32 %v2940, %v3012
        %3014 = vdwg.mxu0
        %3015 = vmatprep.subr.bf16.mxu0 %v2616
        %3016 = vmatpush1.bf16.msra.mxu0 %v2615
        %3017 = vmatprep.subr.bf16.mxu0 %v2620
        %3018 = vmatpush1.bf16.msra.mxu0 %v2619
        %3019 = vmatprep.subr.bf16.mxu0 %v2624
        %3020 = vmatpush1.bf16.msra.mxu0 %v2623
        %3021 = vmatprep.subr.bf16.mxu0 %v2628
        %3022 = vmatpush1.bf16.msra.mxu0 %v2627
        %3023 = vmatprep.subr.bf16.mxu0 %v2632
        %3024 = vmatpush1.bf16.msra.mxu0 %v2631
        %3025 = vmatprep.subr.bf16.mxu0 %v2636
        %3026 = vmatpush1.bf16.msra.mxu0 %v2635
        %3027 = vmatprep.subr.bf16.mxu0 %v2640
        %3028 = vmatpush1.bf16.msra.mxu0 %v2639
        %3029 = vmatprep.subr.bf16.mxu0 %v2644
        %3030 = vmatpush1.bf16.msra.mxu0 %v2643
        %3031 = vmatprep.subr.bf16.mxu0 %v2648
        %3032 = vmatpush1.bf16.msra.mxu0 %v2647
        %3033 = vmatprep.subr.bf16.mxu0 %v2652
        %3034 = vmatpush1.bf16.msra.mxu0 %v2651
        %3035 = vmatprep.subr.bf16.mxu0 %v2656
        %3036 = vmatpush1.bf16.msra.mxu0 %v2655
        %3037 = vmatprep.subr.bf16.mxu0 %v2660
        %3038 = vmatpush1.bf16.msra.mxu0 %v2659
        %3039 = vmatprep.subr.bf16.mxu0 %v2664
        %3040 = vmatpush1.bf16.msra.mxu0 %v2663
        %3041 = vmatprep.subr.bf16.mxu0 %v2668
        %3042 = vmatpush1.bf16.msra.mxu0 %v2667
        %3043 = vmatprep.subr.bf16.mxu0 %v2672
        %3044 = vmatpush1.bf16.msra.mxu0 %v2671
        %3045 = vmatprep.subr.bf16.mxu0 %v2676
        %3046 = vmatpush1.bf16.msra.mxu0 %v2675
        %3047 = vmatprep.mubr.bf16.mxu0 %v2064
        %3048 = vmatmul.mubr.bf16.gmra.mrb[0].mxu0 %v2063
        %v3049 = vpop.f32.mrb[0].mxu0
        %v3050 = vadd.f32 %v2220, %v3049
        %v3051 = vpop.f32.mrb[0].mxu0
        %v3052 = vadd.f32 %v2224, %v3051
        %v3053 = vpop.f32.mrb[0].mxu0
        %v3054 = vadd.f32 %v2220, %v3053
        %v3055 = vpop.f32.mrb[0].mxu0
        %v3056 = vadd.f32 %v2224, %v3055
        %3057 = vmatprep.mubr.bf16.mxu0 %v2068
        %3058 = vmatmul.mubr.bf16.gmra.mrb[0].mxu0 %v2067
        %v3059 = vpop.f32.mrb[0].mxu0
        %v3060 = vadd.f32 %v2220, %v3059
        %v3061 = vpop.f32.mrb[0].mxu0
        %v3062 = vadd.f32 %v2224, %v3061
        %v3063 = vpop.f32.mrb[0].mxu0
        %v3064 = vadd.f32 %v2220, %v3063
        %v3065 = vpop.f32.mrb[0].mxu0
        %v3066 = vadd.f32 %v2224, %v3065
        %3067 = vmatprep.mubr.bf16.mxu0 %v2072
        %3068 = vmatmul.mubr.bf16.gmra.mrb[0].mxu0 %v2071
        %v3069 = vpop.f32.mrb[0].mxu0
        %v3070 = vadd.f32 %v2220, %v3069
        %v3071 = vpop.f32.mrb[0].mxu0
        %v3072 = vadd.f32 %v2224, %v3071
        %v3073 = vpop.f32.mrb[0].mxu0
        %v3074 = vadd.f32 %v2220, %v3073
        %v3075 = vpop.f32.mrb[0].mxu0
        %v3076 = vadd.f32 %v2224, %v3075
        %3077 = vmatprep.mubr.bf16.mxu0 %v2076
        %3078 = vmatmul.mubr.bf16.gmra.mrb[0].mxu0 %v2075
        %v3079 = vpop.f32.mrb[0].mxu0
        %v3080 = vadd.f32 %v2220, %v3079
        %v3081 = vpop.f32.mrb[0].mxu0
        %v3082 = vadd.f32 %v2224, %v3081
        %v3083 = vpop.f32.mrb[0].mxu0
        %v3084 = vadd.f32 %v2220, %v3083
        %v3085 = vpop.f32.mrb[0].mxu0
        %v3086 = vadd.f32 %v2224, %v3085
        %3087 = vdwg.mxu0
        %3088 = vmatprep.subr.bf16.mxu0 %v2680
        %3089 = vmatpush1.bf16.msra.mxu0 %v2679
        %3090 = vmatprep.subr.bf16.mxu0 %v2684
        %3091 = vmatpush1.bf16.msra.mxu0 %v2683
        %3092 = vmatprep.subr.bf16.mxu0 %v2688
        %3093 = vmatpush1.bf16.msra.mxu0 %v2687
        %3094 = vmatprep.subr.bf16.mxu0 %v2692
        %3095 = vmatpush1.bf16.msra.mxu0 %v2691
        %3096 = vmatprep.subr.bf16.mxu0 %v2696
        %3097 = vmatpush1.bf16.msra.mxu0 %v2695
        %3098 = vmatprep.subr.bf16.mxu0 %v2700
        %3099 = vmatpush1.bf16.msra.mxu0 %v2699
        %3100 = vmatprep.subr.bf16.mxu0 %v2704
        %3101 = vmatpush1.bf16.msra.mxu0 %v2703
        %3102 = vmatprep.subr.bf16.mxu0 %v2708
        %3103 = vmatpush1.bf16.msra.mxu0 %v2707
        %3104 = vmatprep.subr.bf16.mxu0 %v2712
        %3105 = vmatpush1.bf16.msra.mxu0 %v2711
        %3106 = vmatprep.subr.bf16.mxu0 %v2716
        %3107 = vmatpush1.bf16.msra.mxu0 %v2715
        %3108 = vmatprep.subr.bf16.mxu0 %v2720
        %3109 = vmatpush1.bf16.msra.mxu0 %v2719
        %3110 = vmatprep.subr.bf16.mxu0 %v2724
        %3111 = vmatpush1.bf16.msra.mxu0 %v2723
        %3112 = vmatprep.subr.bf16.mxu0 %v2728
        %3113 = vmatpush1.bf16.msra.mxu0 %v2727
        %3114 = vmatprep.subr.bf16.mxu0 %v2732
        %3115 = vmatpush1.bf16.msra.mxu0 %v2731
        %3116 = vmatprep.subr.bf16.mxu0 %v2736
        %3117 = vmatpush1.bf16.msra.mxu0 %v2735
        %3118 = vmatprep.subr.bf16.mxu0 %v2740
        %3119 = vmatpush1.bf16.msra.mxu0 %v2739
        %3120 = vmatprep.mubr.bf16.mxu0 %v2066
        %3121 = vmatmul.mubr.bf16.gmra.mrb[0].mxu0 %v2065
        %v3122 = vpop.f32.mrb[0].mxu0
        %v3123 = vadd.f32 %v3050, %v3122
        %v3124 = vpop.f32.mrb[0].mxu0
        %v3125 = vadd.f32 %v3052, %v3124
        %v3126 = vpop.f32.mrb[0].mxu0
        %v3127 = vadd.f32 %v3054, %v3126
        %v3128 = vpop.f32.mrb[0].mxu0
        %v3129 = vadd.f32 %v3056, %v3128
        %3130 = vmatprep.mubr.bf16.mxu0 %v2070
        %3131 = vmatmul.mubr.bf16.gmra.mrb[0].mxu0 %v2069
        %v3132 = vpop.f32.mrb[0].mxu0
        %v3133 = vadd.f32 %v3060, %v3132
        %v3134 = vpop.f32.mrb[0].mxu0
        %v3135 = vadd.f32 %v3062, %v3134
        %v3136 = vpop.f32.mrb[0].mxu0
        %v3137 = vadd.f32 %v3064, %v3136
        %v3138 = vpop.f32.mrb[0].mxu0
        %v3139 = vadd.f32 %v3066, %v3138
        %3140 = vmatprep.mubr.bf16.mxu0 %v2074
        %3141 = vmatmul.mubr.bf16.gmra.mrb[0].mxu0 %v2073
        %v3142 = vpop.f32.mrb[0].mxu0
        %v3143 = vadd.f32 %v3070, %v3142
        %v3144 = vpop.f32.mrb[0].mxu0
        %v3145 = vadd.f32 %v3072, %v3144
        %v3146 = vpop.f32.mrb[0].mxu0
        %v3147 = vadd.f32 %v3074, %v3146
        %v3148 = vpop.f32.mrb[0].mxu0
        %v3149 = vadd.f32 %v3076, %v3148
        %3150 = vmatprep.mubr.bf16.mxu0 %v2078
        %3151 = vmatmul.mubr.bf16.gmra.mrb[0].mxu0 %v2077
        %v3152 = vpop.f32.mrb[0].mxu0
        %v3153 = vadd.f32 %v3080, %v3152
        %v3154 = vpop.f32.mrb[0].mxu0
        %v3155 = vadd.f32 %v3082, %v3154
        %v3156 = vpop.f32.mrb[0].mxu0
        %v3157 = vadd.f32 %v3084, %v3156
        %v3158 = vpop.f32.mrb[0].mxu0
        %v3159 = vadd.f32 %v3086, %v3158
        %3160 = vdwg.mxu0
        %v3161 = vmul.f32 %v2977, %v2977
        %v3162 = vmul.f32 %v2979, %v2979
        %v3163 = vmul.f32 %v3123, %v3123
        %v3164 = vmul.f32 %v3125, %v3125
        %v3165 = vmul.f32 %v2981, %v2981
        %v3166 = vmul.f32 %v2983, %v2983
        %v3167 = vmul.f32 %v3127, %v3127
        %v3168 = vmul.f32 %v3129, %v3129
        %v3169 = vmul.f32 %v2987, %v2987
        %v3170 = vmul.f32 %v2989, %v2989
        %v3171 = vmul.f32 %v3133, %v3133
        %v3172 = vmul.f32 %v3135, %v3135
        %v3173 = vmul.f32 %v2991, %v2991
        %v3174 = vmul.f32 %v2993, %v2993
        %v3175 = vmul.f32 %v3137, %v3137
        %v3176 = vmul.f32 %v3139, %v3139
        %v3177 = vmul.f32 %v2997, %v2997
        %v3178 = vmul.f32 %v2999, %v2999
        %v3179 = vmul.f32 %v3143, %v3143
        %v3180 = vmul.f32 %v3145, %v3145
        %v3181 = vmul.f32 %v3001, %v3001
        %v3182 = vmul.f32 %v3003, %v3003
        %v3183 = vmul.f32 %v3147, %v3147
        %v3184 = vmul.f32 %v3149, %v3149
        %v3185 = vmul.f32 %v3007, %v3007
        %v3186 = vmul.f32 %v3009, %v3009
        %v3187 = vmul.f32 %v3153, %v3153
        %v3188 = vmul.f32 %v3155, %v3155
        %v3189 = vmul.f32 %v3011, %v3011
        %v3190 = vmul.f32 %v3013, %v3013
        %v3191 = vmul.f32 %v3157, %v3157
        %v3192 = vmul.f32 %v3159, %v3159
        %v3193 = vadd.f32 %v3161, %v3162
        %v3194 = vadd.f32 %v3193, %v3163
        %v3195 = vadd.f32 %v3194, %v3164
        %3196 = vadd.xlane.f32.xlu0 %v3195
        %v3197 = vpop.xlane.xlu0 %3196
        %v3198 = vadd.f32 %v3165, %v3166
        %v3199 = vadd.f32 %v3198, %v3167
        %v3200 = vadd.f32 %v3199, %v3168
        %3201 = vadd.xlane.f32.xlu0 %v3200
        %v3202 = vpop.xlane.xlu0 %3201
        %v3203 = vadd.f32 %v3169, %v3170
        %v3204 = vadd.f32 %v3203, %v3171
        %v3205 = vadd.f32 %v3204, %v3172
        %3206 = vadd.xlane.f32.xlu0 %v3205
        %v3207 = vpop.xlane.xlu0 %3206
        %v3208 = vadd.f32 %v3173, %v3174
        %v3209 = vadd.f32 %v3208, %v3175
        %v3210 = vadd.f32 %v3209, %v3176
        %3211 = vadd.xlane.f32.xlu0 %v3210
        %v3212 = vpop.xlane.xlu0 %3211
        %v3213 = vadd.f32 %v3177, %v3178
        %v3214 = vadd.f32 %v3213, %v3179
        %v3215 = vadd.f32 %v3214, %v3180
        %3216 = vadd.xlane.f32.xlu0 %v3215
        %v3217 = vpop.xlane.xlu0 %3216
        %v3218 = vadd.f32 %v3181, %v3182
        %v3219 = vadd.f32 %v3218, %v3183
        %v3220 = vadd.f32 %v3219, %v3184
        %3221 = vadd.xlane.f32.xlu0 %v3220
        %v3222 = vpop.xlane.xlu0 %3221
        %v3223 = vadd.f32 %v3185, %v3186
        %v3224 = vadd.f32 %v3223, %v3187
        %v3225 = vadd.f32 %v3224, %v3188
        %3226 = vadd.xlane.f32.xlu0 %v3225
        %v3227 = vpop.xlane.xlu0 %3226
        %v3228 = vadd.f32 %v3189, %v3190
        %v3229 = vadd.f32 %v3228, %v3191
        %v3230 = vadd.f32 %v3229, %v3192
        %3231 = vadd.xlane.f32.xlu0 %v3230
        %v3232 = vpop.xlane.xlu0 %3231
        %v3233 = vadd.f32 %v3197, 1e-12
        %v3234 = vadd.f32 %v3202, 1e-12
        %v3235 = vadd.f32 %v3207, 1e-12
        %v3236 = vadd.f32 %v3212, 1e-12
        %v3237 = vadd.f32 %v3217, 1e-12
        %v3238 = vadd.f32 %v3222, 1e-12
        %v3239 = vadd.f32 %v3227, 1e-12
        %v3240 = vadd.f32 %v3232, 1e-12
        %v3241 = vrsqrt.pop %v3233
        %v3242 = vrsqrt.pop %v3234
        %v3243 = vrsqrt.pop %v3235
        %v3244 = vrsqrt.pop %v3236
        %v3245 = vrsqrt.pop %v3237
        %v3246 = vrsqrt.pop %v3238
        %v3247 = vrsqrt.pop %v3239
        %v3248 = vrsqrt.pop %v3240
        %v3249 = vmul.f32 %v2977, %v3241
        %v3250 = vmul.f32 %v2979, %v3241
        %v3251 = vmul.f32 %v3123, %v3241
        %v3252 = vmul.f32 %v3125, %v3241
        %v3253 = vmul.f32 %v2981, %v3242
        %v3254 = vmul.f32 %v2983, %v3242
        %v3255 = vmul.f32 %v3127, %v3242
        %v3256 = vmul.f32 %v3129, %v3242
        %v3257 = vmul.f32 %v2987, %v3243
        %v3258 = vmul.f32 %v2989, %v3243
        %v3259 = vmul.f32 %v3133, %v3243
        %v3260 = vmul.f32 %v3135, %v3243
        %v3261 = vmul.f32 %v2991, %v3244
        %v3262 = vmul.f32 %v2993, %v3244
        %v3263 = vmul.f32 %v3137, %v3244
        %v3264 = vmul.f32 %v3139, %v3244
        %v3265 = vmul.f32 %v2997, %v3245
        %v3266 = vmul.f32 %v2999, %v3245
        %v3267 = vmul.f32 %v3143, %v3245
        %v3268 = vmul.f32 %v3145, %v3245
        %v3269 = vmul.f32 %v3001, %v3246
        %v3270 = vmul.f32 %v3003, %v3246
        %v3271 = vmul.f32 %v3147, %v3246
        %v3272 = vmul.f32 %v3149, %v3246
        %v3273 = vmul.f32 %v3007, %v3247
        %v3274 = vmul.f32 %v3009, %v3247
        %v3275 = vmul.f32 %v3153, %v3247
        %v3276 = vmul.f32 %v3155, %v3247
        %v3277 = vmul.f32 %v3011, %v3248
        %v3278 = vmul.f32 %v3013, %v3248
        %v3279 = vmul.f32 %v3157, %v3248
        %v3280 = vmul.f32 %v3159, %v3248
        %v3281 = vpack.c.bf16 %v3253, %v3249
        %v3282 = vpack.c.bf16 %v3254, %v3250
        %v3283 = vpack.c.bf16 %v3255, %v3251
        %v3284 = vpack.c.bf16 %v3256, %v3252
        %v3285 = vpack.c.bf16 %v3261, %v3257
        %v3286 = vpack.c.bf16 %v3262, %v3258
        %v3287 = vpack.c.bf16 %v3263, %v3259
        %v3288 = vpack.c.bf16 %v3264, %v3260
        %v3289 = vpack.c.bf16 %v3269, %v3265
        %v3290 = vpack.c.bf16 %v3270, %v3266
        %v3291 = vpack.c.bf16 %v3271, %v3267
        %v3292 = vpack.c.bf16 %v3272, %v3268
        %v3293 = vpack.c.bf16 %v3277, %v3273
        %v3294 = vpack.c.bf16 %v3278, %v3274
        %v3295 = vpack.c.bf16 %v3279, %v3275
        %v3296 = vpack.c.bf16 %v3280, %v3276
        %v3313 = vunpack.c.l.b16 %v3281
        %v3314 = vunpack.c.l.b16 %v3282
        %v3315 = vunpack.c.l.b16 %v3283
        %v3316 = vunpack.c.l.b16 %v3284
        %v3317 = vunpack.c.h.b16 %v3281
        %v3318 = vunpack.c.h.b16 %v3282
        %v3319 = vunpack.c.h.b16 %v3283
        %v3320 = vunpack.c.h.b16 %v3284
        %v3321 = vunpack.c.l.b16 %v3285
        %v3322 = vunpack.c.l.b16 %v3286
        %v3323 = vunpack.c.l.b16 %v3287
        %v3324 = vunpack.c.l.b16 %v3288
        %v3325 = vunpack.c.h.b16 %v3285
        %v3326 = vunpack.c.h.b16 %v3286
        %v3327 = vunpack.c.h.b16 %v3287
        %v3328 = vunpack.c.h.b16 %v3288
        %v3329 = vunpack.c.l.b16 %v3289
        %v3330 = vunpack.c.l.b16 %v3290
        %v3331 = vunpack.c.l.b16 %v3291
        %v3332 = vunpack.c.l.b16 %v3292
        %v3333 = vunpack.c.h.b16 %v3289
        %v3334 = vunpack.c.h.b16 %v3290
        %v3335 = vunpack.c.h.b16 %v3291
        %v3336 = vunpack.c.h.b16 %v3292
        %v3337 = vunpack.c.l.b16 %v3293
        %v3338 = vunpack.c.l.b16 %v3294
        %v3339 = vunpack.c.l.b16 %v3295
        %v3340 = vunpack.c.l.b16 %v3296
        %v3341 = vunpack.c.h.b16 %v3293
        %v3342 = vunpack.c.h.b16 %v3294
        %v3343 = vunpack.c.h.b16 %v3295
        %v3344 = vunpack.c.h.b16 %v3296
        %v3345 = vpack.c.b16 %v3314, %v3313
        %v3346 = vpack.c.b16 %v3316, %v3315
        %v3347 = vpack.c.b16 %v3318, %v3317
        %v3348 = vpack.c.b16 %v3320, %v3319
        %v3349 = vpack.c.b16 %v3322, %v3321
        %v3350 = vpack.c.b16 %v3324, %v3323
        %v3351 = vpack.c.b16 %v3326, %v3325
        %v3352 = vpack.c.b16 %v3328, %v3327
        %v3353 = vpack.c.b16 %v3330, %v3329
        %v3354 = vpack.c.b16 %v3332, %v3331
        %v3355 = vpack.c.b16 %v3334, %v3333
        %v3356 = vpack.c.b16 %v3336, %v3335
        %v3357 = vpack.c.b16 %v3338, %v3337
        %v3358 = vpack.c.b16 %v3340, %v3339
        %v3359 = vpack.c.b16 %v3342, %v3341
        %v3360 = vpack.c.b16 %v3344, %v3343
        %3377 = vst [vmem:[%s272] sm:$0xff] %v3345
        %3378 = vst [vmem:[%s272 + $0x8] sm:$0xff] %v3346
        %3379 = vst [vmem:[%s272 + $0x10] sm:$0xff] %v3347
        %3380 = vst [vmem:[%s272 + $0x18] sm:$0xff] %v3348
        %3381 = vst [vmem:[%s272 + $0x20] sm:$0xff] %v3349
        %3382 = vst [vmem:[%s272 + $0x28] sm:$0xff] %v3350
        %3383 = vst [vmem:[%s272 + $0x30] sm:$0xff] %v3351
        %3384 = vst [vmem:[%s272 + $0x38] sm:$0xff] %v3352
        %3385 = vst [vmem:[%s272 + $0x40] sm:$0xff] %v3353
        %3386 = vst [vmem:[%s272 + $0x48] sm:$0xff] %v3354
        %3387 = vst [vmem:[%s272 + $0x50] sm:$0xff] %v3355
        %3388 = vst [vmem:[%s272 + $0x58] sm:$0xff] %v3356
        %3389 = vst [vmem:[%s272 + $0x60] sm:$0xff] %v3357
        %3390 = vst [vmem:[%s272 + $0x68] sm:$0xff] %v3358
        %3391 = vst [vmem:[%s272 + $0x70] sm:$0xff] %v3359
        %3392 = vst [vmem:[%s272 + $0x78] sm:$0xff] %v3360
        %s3393 = sand.u32 %s141, 1
        %s3394 = scalar_lea.sflag [#allocation4], %s3393
        %s3395 = sand.u32 %s141, 1
        %s3396 = smul.addr %s3395, 128
        %s3397 = scalar_lea.vmem [#allocation8], %s3396
        // Predicated region
        $region53: #{tpu_custom_call.1} parent=39 // pred_check
          %p3398 = pneg %p151
        $region54: #{tpu_custom_call.1} parent=39 // pred_check_branch
          %3400 = sbr.rel (%p3398) target = $region56
        $region55: #{tpu_custom_call.1} parent=39 // pred_region
          %s3401 = smul.u32 8, %s23
          %s3403 = ssub.s32 2048, 2048
          %3404 = vsyncadd %s3394, %s3403
          %s3405 = smul.addr %s3401, 4
          %s3406 = smul.addr %s3405, 64
          %s3407 = scalar_lea.hbm %s5, %s3406
          %s3408 = sshll.u32 %s3397, 4
          %s3409 = int_to_ptr.vmem [resolvable:$true] %s3408
          %3414 = dma.vmem_to_hbm [thread:$0]  %s3409, 2048, %s3407, %s3394, 256, 256, 16
        $region56: #{tpu_custom_call.1} parent=39 // pred_fallthru
          _
      $region40: #{tpu_custom_call.1} parent=5 // pred_fallthru
        _
      %p3415 = scmp.le.s32.totalorder 2, %s18
      // Predicated region
      $region57: #{tpu_custom_call.1} parent=5 // pred_check
        %p3416 = pneg %p3415
      $region58: #{tpu_custom_call.1} parent=5 // pred_check_branch
        %3418 = sbr.rel (%p3416) target = $region60
      $region59: #{tpu_custom_call.1} parent=5 // pred_region
        %s3419 = ssub.s32 %s18, 2
        // Predicated region
        $region61: #{tpu_custom_call.1} parent=59 // pred_check
          %p3420 = pneg %p157
        $region62: #{tpu_custom_call.1} parent=59 // pred_check_branch
          %3422 = sbr.rel (%p3420) target = $region64
        $region63: #{tpu_custom_call.1} parent=59 // pred_region
          %s3423 = sand.u32 %s142, 1
          %s3424 = scalar_lea.sflag [#allocation4], %s3423
          %s3425 = sand.u32 %s142, 1
          %s3426 = smul.addr %s3425, 128
          %s3427 = scalar_lea.vmem [#allocation8], %s3426
          %3428 = dma.done %s3424, 2048
        $region64: #{tpu_custom_call.1} parent=59 // pred_fallthru
          _
      $region60: #{tpu_custom_call.1} parent=5 // pred_fallthru
        _
    $region6: #{tpu_custom_call.1} parent=1 // loop_footer
      %s22 = sadd.s32 1, %s18
    $region7: #{tpu_custom_call.1} parent=1 // loop_footer_branch
      %17 = sbr.rel target = $region3
    $region8: #{tpu_custom_call.1} parent=1 // loop_exit
      _
    %3429 = vsyncpa [#allocation3], 1
    %s3430 = scalar_lea.sflag [#allocation3], 1
    %3431 = vsyncpa %s3430, 1
    %3432 = vsyncpa [#allocation6], 1
    %3433 = vsyncpa [#allocation4], 1
    %s3434 = scalar_lea.sflag [#allocation4], 1
    %3435 = vsyncpa %s3434, 1

</llo_original>
